<compile_context>
chip_gen: v7x
topology: tpu7x:2x2x1
jax: 0.10.0
libtpu: 0.0.40
codegen_flags: <defaults>
</compile_context>

<pallas_src>
import functools
import numpy as np
import jax
import jax.numpy as jnp
from jax.experimental import pallas as pl
from jax.experimental.pallas import tpu as pltpu


# Use the direct (HW,HW) Kronecker DFT while its bf16 matrices are small (full
# MXU utilization, fewest matmul calls); switch to the separable row/column DFT
# above this many pixels (bounded VMEM, ~HW/(H+W)x fewer FLOPs).
_SEPARABLE_MIN_HW = 2048


def _round_up(x, m):
    return ((x + m - 1) // m) * m


def _dft_matrices(n):
    # Ortho-normalized DFT cos/sin matrices (symmetric), computed in float64.
    k = np.arange(n)
    ang = 2.0 * np.pi * np.outer(k, k) / n
    c = np.cos(ang) / np.sqrt(n)
    s = np.sin(ang) / np.sqrt(n)
    return c, s


def _flat_dft_matrices(h, w):
    # Row-major flattened 2-D ortho DFT:  rm(Y) = (F_H (x) F_W) rm(X), F = C - iS.
    # Both Kr and Ki are symmetric, so y = x @ K.
    ch, sh = _dft_matrices(h)
    cw, sw = _dft_matrices(w)
    kr = np.kron(ch, cw) - np.kron(sh, sw)
    ki = -(np.kron(ch, sw) + np.kron(sh, cw))
    return kr, ki


def _gaussian_flat(h, w, sigma, mu):
    # Exact replica of frequency.gaussian_filter + np.fft.ifftshift followed by
    # the flat torch .view(..., H, W) reinterpretation done in loss_formulation,
    # returned flattened to (1, H*W) in row-major (h-major) spectral order.
    x, y = np.meshgrid(np.linspace(-1, 1, h), np.linspace(-1, 1, w))
    d = np.sqrt(x * x + y * y)
    g = np.exp(-((d - mu) ** 2 / (2.0 * sigma ** 2)))
    g = np.fft.ifftshift(g)                        # shape (w, h)
    return g.reshape(1, h * w).astype(np.float32)  # replicates torch .view


def _loss_pixels(pr, pim, t1r, t1i, t2r, t2i, g1, g2, g12, alpha):
    # Reference in-place aliasing: recon real scaled by BOTH gaussians,
    # target1 real by g1, target2 real by g2; imaginary parts unscaled.  The
    # same modified spectra feed both the weights and the frequency distances.
    ar = g12 * pr
    d1 = (ar - g1 * t1r) ** 2 + (pim - t1i) ** 2   # freq_distance1
    d2 = (ar - g2 * t2r) ** 2 + (pim - t2i) ** 2   # freq_distance2
    m1 = jnp.sqrt(d1)
    m2 = jnp.sqrt(d2)
    if alpha != 1.0:                               # ** self.alpha (alpha=1 default)
        m1 = m1 ** alpha
        m2 = m2 ** alpha
    # Per-image max normalization (batch_matrix=False): reduce every axis but
    # the image axis 0; divisions use EUP approx reciprocals.
    mx1, mx2 = m1, m2
    for ax in range(m1.ndim - 1, 0, -1):
        mx1 = jnp.max(mx1, axis=ax, keepdims=True)
        mx2 = jnp.max(mx2, axis=ax, keepdims=True)
    m1 = m1 * pl.reciprocal(mx1, approx=True)
    m2 = m2 * pl.reciprocal(mx2, approx=True)
    m1 = jnp.clip(jnp.where(jnp.isnan(m1), 0.0, m1), 0.0, 1.0)
    m2 = jnp.clip(jnp.where(jnp.isnan(m2), 0.0, m2), 0.0, 1.0)
    # nw1*d1 + nw2*d2 == (m1*d1 + m2*d2) / (m1 + m2): one reciprocal per pixel.
    return (m1 * d1 + m2 * d2) * pl.reciprocal(m1 + m2, approx=True)


# ---------------------------------------------------------------------------
# Path A: Kronecker DFT -- images flattened to (TB, HW), 6 lane-dense matmuls.
# ---------------------------------------------------------------------------
def _freq_kron_kernel(pred_ref, t1_ref, t2_ref, kr_ref, ki_ref,
                      g1_ref, g2_ref, g12_ref, out_ref,
                      *, m_total, tb, alpha, needs_mask, precision):
    f32 = jnp.float32
    dot = functools.partial(jnp.dot, preferred_element_type=f32,
                            precision=precision)
    kr = kr_ref[...]          # (HW, HW), bf16 by default -> full bf16 MXU rate
    ki = ki_ref[...]
    x, t1, t2 = pred_ref[...], t1_ref[...], t2_ref[...]

    # 2-D ortho DFT of each flattened image: bf16 x bf16 -> f32 accumulation.
    pr, pim = dot(x, kr), dot(x, ki)
    t1r, t1i = dot(t1, kr), dot(t1, ki)
    t2r, t2i = dot(t2, kr), dot(t2, ki)

    loss_px = _loss_pixels(pr, pim, t1r, t1i, t2r, t2i,
                           g1_ref[...], g2_ref[...], g12_ref[...], alpha)

    if needs_mask:  # zero rows belonging to the partial trailing block / pad
        row = pl.program_id(0) * tb + jax.lax.broadcasted_iota(
            jnp.int32, (tb, 1), 0)
        loss_px = jnp.where(row < m_total, loss_px, 0.0)

    hw = loss_px.shape[-1]
    # Lane-dense partial: fold TB rows into an (8, HW) tile with sublane-aligned
    # VPU adds; the final sum/mean happens outside the kernel.
    out_ref[0] = jnp.sum(loss_px.reshape(tb // 8, 8, hw), axis=0)


# ---------------------------------------------------------------------------
# Path B: separable row/column DFT -- batched (flash-attention style) matmuls.
# ---------------------------------------------------------------------------
def _freq_separable_kernel(pred_ref, t1_ref, t2_ref,
                           cw_ref, sw_ref, ch_ref, sh_ref,
                           g1_ref, g2_ref, g12_ref, valid_ref, out_ref,
                           *, alpha, precision):
    f32 = jnp.float32
    cdt = cw_ref.dtype                           # MXU input dtype (bf16 default)
    tb = pred_ref.shape[0]
    h = ch_ref.shape[0]
    w = cw_ref.shape[0]
    mm = functools.partial(jnp.einsum, preferred_element_type=f32,
                           precision=precision)

    # Grid-invariant DFT factors, broadcast once per grid step so both DFT
    # stages are plain batched MXU matmuls (no general contractions).
    cw_b = jnp.broadcast_to(cw_ref[...][None], (tb, w, w))
    sw_b = jnp.broadcast_to(sw_ref[...][None], (tb, w, w))
    ch_b = jnp.broadcast_to(ch_ref[...][None], (tb, h, h))
    sh_b = jnp.broadcast_to(sh_ref[...][None], (tb, h, h))

    def dft2(x_ref):
        x = x_ref[...].astype(cdt)                       # (tb, h, w)
        ac = mm('bhw,bkw->bhk', x, cw_b)                 # sum_w Cw[k,w] x[h,w]
        as_ = mm('bhw,bkw->bhk', x, sw_b)
        ac_c, as_c = ac.astype(cdt), as_.astype(cdt)
        yr = (mm('bmh,bhk->bmk', ch_b, ac_c)
              - mm('bmh,bhk->bmk', sh_b, as_c))
        yi = -(mm('bmh,bhk->bmk', ch_b, as_c)
               + mm('bmh,bhk->bmk', sh_b, ac_c))
        return yr, yi                                    # (tb, h_freq, w_freq)

    pr, pim = dft2(pred_ref)
    t1r, t1i = dft2(t1_ref)
    t2r, t2i = dft2(t2_ref)

    loss_px = _loss_pixels(pr, pim, t1r, t1i, t2r, t2i,
                           g1_ref[...], g2_ref[...], g12_ref[...], alpha)

    # Per-row validity (avoids a rank-3 iota): pad / edge-block rows -> 0.
    keep = valid_ref[...] > 0.0                          # (tb, 1, 1) bool
    loss_px = jnp.where(keep, loss_px, 0.0)

    out_ref[0] = jnp.sum(loss_px, axis=0)                # (h, w) lane-dense


# ---------------------------------------------------------------------------
# Wrapper
# ---------------------------------------------------------------------------
def _c2(i):
    return (0, 0)


def _c3(i):
    return (0, 0, 0)


_CONST_IDX = {2: _c2, 3: _c3}


def _const_spec(shape, single_buffer):
    idx = _CONST_IDX[len(shape)]
    if single_buffer:
        # Grid-invariant block: one VMEM buffer instead of the default two.
        return pl.BlockSpec(shape, idx, pipeline_mode=pl.Buffered(1))
    return pl.BlockSpec(shape, idx)


def frequency_loss(pred, target1, target2, *, alpha=1.0, block_rows=None,
                   method="auto", precision=None):
    """Pallas TPU equivalent of frequency(loss_weight=1, alpha=1, patch_factor=1).forward.

    Only the module defaults are implemented (matrix=None, ave_spectrum=False,
    log_matrix=False, batch_matrix=False).  `precision` (e.g.
    jax.lax.Precision.HIGHEST) keeps the DFT path in f32 for tight tolerances;
    the default path feeds the MXU bf16 explicitly.
    """
    N, C, H, W = pred.shape
    P = 1  # patch_factor
    assert P * P * C == 1, "reference .view of the gaussian requires P*P*C == 1"
    M = N * P * P * C
    HW = H * W

    use_separable = (method == "separable") or (
        method == "auto" and HW > _SEPARABLE_MIN_HW)

    # Explicit MXU input dtype (default precision truncates f32 to bf16 anyway).
    mxu_dtype = jnp.float32 if precision is not None else jnp.bfloat16
    mat_bytes = jnp.dtype(mxu_dtype).itemsize

    # ---- VMEM budget -> images per grid step (tb) ---------------------------
    try:
        vmem_cap = int(pltpu.get_tpu_info().vmem_capacity_bytes)
    except Exception:
        vmem_cap = 64 << 20                     # conservative (v7x per-core)
    vmem_cap = min(vmem_cap, 128 << 20)
    vmem_budget = int(vmem_cap * 0.75)          # headroom for internal scratch

    if block_rows is None:
        block_rows = 512 if HW <= 512 else 256  # amortize ~0.35us/step overhead
    block_rows = max(8, _round_up(block_rows, 8))

    live_f32 = 14                               # live (tb, HW) f32 temporaries
    if use_separable:
        fixed = 4 * (H * H + W * W) * mat_bytes + 3 * HW * 4 * 2 + 2 * HW * 4
        per_row = (3 * HW * mat_bytes * 2          # double-buffered image tiles
                   + 2 * (H * H + W * W) * mat_bytes  # broadcast DFT factors
                   + live_f32 * HW * 4)
    else:
        fixed = 2 * 2 * HW * HW * mat_bytes + 3 * HW * 4 * 2 + 2 * 8 * HW * 4
        per_row = 3 * HW * mat_bytes * 2 + live_f32 * HW * 4
    tb_vmem = max(8, ((vmem_budget - fixed) // max(per_row, 1)) // 8 * 8)

    # >=2 grid blocks whenever the batch allows it, so both v7x TensorCores get
    # work under dimension_semantics=("parallel",); no-op on v5e/v6e.
    tb_two = max(8, _round_up(pl.cdiv(M, 2), 8))
    tb = max(8, min(block_rows, tb_vmem, tb_two))

    # No bulk padding: only round the batch axis to the 8-sublane granule (a
    # no-op for typical batch sizes); the trailing partial block is masked
    # inside the kernel.
    m8 = _round_up(M, 8)
    num_blocks = pl.cdiv(m8, tb)
    needs_mask = (num_blocks * tb != M)

    def prep(x, shape_tail):
        x2 = x.reshape((M,) + shape_tail).astype(mxu_dtype)
        if m8 != M:
            x2 = jnp.pad(x2, ((0, m8 - M),) + ((0, 0),) * len(shape_tail))
        return x2

    g1 = _gaussian_flat(H, W, 2.0, 0)
    g2 = _gaussian_flat(H, W, 1.0, 0)
    g12 = (g1 * g2).astype(np.float32)          # g1*g2 folded on the host

    cparams = pltpu.CompilerParams(
        dimension_semantics=("parallel",),
        vmem_limit_bytes=vmem_budget)

    if use_separable:
        imgs = [prep(pred, (H, W)), prep(target1, (H, W)), prep(target2, (H, W))]
        ch, sh = _dft_matrices(H)
        cw, sw = _dft_matrices(W)
        mats = [jnp.asarray(m, dtype=mxu_dtype) for m in (cw, sw, ch, sh)]
        gs = [jnp.asarray(g.reshape(1, H, W)) for g in (g1, g2, g12)]
        valid = jnp.asarray(
            (np.arange(num_blocks * tb) < M).astype(np.float32)
            .reshape(num_blocks * tb, 1, 1))
        kernel = functools.partial(_freq_separable_kernel, alpha=alpha,
                                   precision=precision)
        img_spec = pl.BlockSpec((tb, H, W), lambda i: (i, 0, 0))
        valid_spec = pl.BlockSpec((tb, 1, 1), lambda i: (i, 0, 0))
        out_shape = jax.ShapeDtypeStruct((num_blocks, H, W), jnp.float32)
        out_spec = pl.BlockSpec((1, H, W), lambda i: (i, 0, 0))

        def call(single_buffer):
            mat_specs = [_const_spec((W, W), single_buffer),
                         _const_spec((W, W), single_buffer),
                         _const_spec((H, H), single_buffer),
                         _const_spec((H, H), single_buffer)]
            g_specs = [_const_spec((1, H, W), single_buffer) for _ in range(3)]
            return pl.pallas_call(
                kernel, out_shape=out_shape,
                grid_spec=pltpu.PrefetchScalarGridSpec(
                    num_scalar_prefetch=0, grid=(num_blocks,),
                    in_specs=[img_spec] * 3 + mat_specs + g_specs + [valid_spec],
                    out_specs=out_spec),
                compiler_params=cparams,
            )(*imgs, *mats, *gs, valid)
    else:
        imgs = [prep(pred, (HW,)), prep(target1, (HW,)), prep(target2, (HW,))]
        kr, ki = _flat_dft_matrices(H, W)
        mats = [jnp.asarray(m, dtype=mxu_dtype) for m in (kr, ki)]
        gs = [jnp.asarray(g) for g in (g1, g2, g12)]
        kernel = functools.partial(_freq_kron_kernel, m_total=M, tb=tb,
                                   alpha=alpha, needs_mask=needs_mask,
                                   precision=precision)
        img_spec = pl.BlockSpec((tb, HW), lambda i: (i, 0))
        out_shape = jax.ShapeDtypeStruct((num_blocks, 8, HW), jnp.float32)
        out_spec = pl.BlockSpec((1, 8, HW), lambda i: (i, 0, 0))

        def call(single_buffer):
            mat_specs = [_const_spec((HW, HW), single_buffer) for _ in range(2)]
            g_specs = [_const_spec((1, HW), single_buffer) for _ in range(3)]
            return pl.pallas_call(
                kernel, out_shape=out_shape,
                grid_spec=pltpu.PrefetchScalarGridSpec(
                    num_scalar_prefetch=0, grid=(num_blocks,),
                    in_specs=[img_spec] * 3 + mat_specs + g_specs,
                    out_specs=out_spec),
                compiler_params=cparams,
            )(*imgs, *mats, *gs)

    try:
        partials = call(single_buffer=True)
    except Exception:
        # pipeline_mode=pl.Buffered(1) unsupported on this jax build: fall back
        # to default double-buffering of the grid-invariant inputs.
        partials = call(single_buffer=False)

    return jnp.sum(partials) / jnp.float32(M * H * W)


# ---------------------------------------------------------------------------
# Pure-NumPy reference (replicates the PyTorch forward, incl. in-place aliasing)
# ---------------------------------------------------------------------------
def _frequency_loss_ref_np(pred, t1, t2, alpha=1.0):
    pred = np.asarray(pred, dtype=np.float32)
    t1 = np.asarray(t1, dtype=np.float32)
    t2 = np.asarray(t2, dtype=np.float32)
    _, _, H, W = pred.shape

    def to_freq(x):
        f = np.fft.fft2(x, norm="ortho")
        return f.real.astype(np.float32), f.imag.astype(np.float32)

    pr, pim = to_freq(pred)
    t1r, t1i = to_freq(t1)
    t2r, t2i = to_freq(t2)
    g1 = _gaussian_flat(H, W, 2.0, 0).reshape(H, W)
    g2 = _gaussian_flat(H, W, 1.0, 0).reshape(H, W)

    ar = g1 * g2 * pr
    d1 = (ar - g1 * t1r) ** 2 + (pim - t1i) ** 2
    d2 = (ar - g2 * t2r) ** 2 + (pim - t2i) ** 2
    m1 = np.sqrt(d1) ** alpha
    m2 = np.sqrt(d2) ** alpha
    with np.errstate(invalid="ignore", divide="ignore"):
        m1 = m1 / m1.max(axis=(-2, -1), keepdims=True)
        m2 = m2 / m2.max(axis=(-2, -1), keepdims=True)
    m1 = np.clip(np.where(np.isnan(m1), 0.0, m1), 0.0, 1.0)
    m2 = np.clip(np.where(np.isnan(m2), 0.0, m2), 0.0, 1.0)
    with np.errstate(invalid="ignore", divide="ignore"):
        w1 = m1 / (m1 + m2)
        w2 = m2 / (m1 + m2)
    return float(np.mean(w1 * d1 + w2 * d2))


if __name__ == "__main__":
    key = jax.random.PRNGKey(0)
    k1, k2, k3 = jax.random.split(key, 3)
    # batch=2, channels=1 (forced by the reference's gaussian .view), 16x16
    shape = (2, 1, 16, 16)
    pred = jax.random.normal(k1, shape, dtype=jnp.float32)
    target1 = jax.random.normal(k2, shape, dtype=jnp.float32)
    target2 = jax.random.normal(k3, shape, dtype=jnp.float32)

    ref = _frequency_loss_ref_np(pred, target1, target2)

    # Default path at this size: Kronecker DFT, bf16 MXU feed.
    loss = frequency_loss(pred, target1, target2)
    jax.block_until_ready(loss)
    got = float(loss)
    assert np.isfinite(got), f"non-finite loss: {got}"
    assert abs(got - ref) <= 2e-2 * abs(ref) + 1e-5, f"kron mismatch: {got} vs {ref}"

    # Separable row/column DFT path (used automatically for large images).
    loss_sep = frequency_loss(pred, target1, target2, method="separable")
    jax.block_until_ready(loss_sep)
    got_sep = float(loss_sep)
    assert np.isfinite(got_sep), f"non-finite loss: {got_sep}"
    assert abs(got_sep - ref) <= 3e-2 * abs(ref) + 1e-5, \
        f"separable mismatch: {got_sep} vs {ref}"

    print("KERNEL_OK")
</pallas_src>

<mosaic_0001>
module attributes {stable_mosaic.version = 11 : i64} {
  func.func @_freq_kron_kernel(%arg0: i32, %arg1: memref<8x256xbf16, #tpu.memory_space<vmem>>, %arg2: memref<8x256xbf16, #tpu.memory_space<vmem>>, %arg3: memref<8x256xbf16, #tpu.memory_space<vmem>>, %arg4: memref<256x256xbf16, #tpu.memory_space<vmem>>, %arg5: memref<256x256xbf16, #tpu.memory_space<vmem>>, %arg6: memref<1x256xf32, #tpu.memory_space<vmem>>, %arg7: memref<1x256xf32, #tpu.memory_space<vmem>>, %arg8: memref<1x256xf32, #tpu.memory_space<vmem>>, %arg9: memref<1x8x256xf32, #tpu.memory_space<vmem>>) attributes {dimension_semantics = [#tpu.dimension_semantics<parallel>], iteration_bounds = array<i64: 1>, scalar_prefetch = 0 : i64, scratch_operands = 0 : i64, tpu.core_type = #tpu.core_type<tc>, window_params = [{transform_indices = @transform_0, window_bounds = array<i64: 8, 256>}, {transform_indices = @transform_1, window_bounds = array<i64: 8, 256>}, {transform_indices = @transform_2, window_bounds = array<i64: 8, 256>}, {pipeline_mode = #tpu.pipeline_mode<synchronous>, transform_indices = @transform_3, window_bounds = array<i64: 256, 256>}, {pipeline_mode = #tpu.pipeline_mode<synchronous>, transform_indices = @transform_4, window_bounds = array<i64: 256, 256>}, {pipeline_mode = #tpu.pipeline_mode<synchronous>, transform_indices = @transform_5, window_bounds = array<i64: 1, 256>}, {pipeline_mode = #tpu.pipeline_mode<synchronous>, transform_indices = @transform_6, window_bounds = array<i64: 1, 256>}, {pipeline_mode = #tpu.pipeline_mode<synchronous>, transform_indices = @transform_7, window_bounds = array<i64: 1, 256>}, {transform_indices = @transform_8, window_bounds = array<i64: 1, 8, 256>}]} {
    %c0 = arith.constant 0 : index
    %c0_0 = arith.constant 0 : index
    %0 = vector.load %arg4[%c0, %c0_0] : memref<256x256xbf16, #tpu.memory_space<vmem>>, vector<256x256xbf16>
    %c0_1 = arith.constant 0 : index
    %c0_2 = arith.constant 0 : index
    %1 = vector.load %arg5[%c0_1, %c0_2] : memref<256x256xbf16, #tpu.memory_space<vmem>>, vector<256x256xbf16>
    %c0_3 = arith.constant 0 : index
    %c0_4 = arith.constant 0 : index
    %2 = vector.load %arg1[%c0_3, %c0_4] : memref<8x256xbf16, #tpu.memory_space<vmem>>, vector<8x256xbf16>
    %c0_5 = arith.constant 0 : index
    %c0_6 = arith.constant 0 : index
    %3 = vector.load %arg2[%c0_5, %c0_6] : memref<8x256xbf16, #tpu.memory_space<vmem>>, vector<8x256xbf16>
    %c0_7 = arith.constant 0 : index
    %c0_8 = arith.constant 0 : index
    %4 = vector.load %arg3[%c0_7, %c0_8] : memref<8x256xbf16, #tpu.memory_space<vmem>>, vector<8x256xbf16>
    %cst = arith.constant dense<0.000000e+00> : vector<8x256xf32>
    %5 = tpu.matmul %2, %0, %cst {dimension_numbers = #tpu.dot_dimension_numbers<[1], [0], [0], [1], [0, 0, 1, 1], [], []>} : vector<8x256xbf16>, vector<256x256xbf16>, vector<8x256xf32> -> vector<8x256xf32>
    %cst_9 = arith.constant dense<0.000000e+00> : vector<8x256xf32>
    %6 = tpu.matmul %2, %1, %cst_9 {dimension_numbers = #tpu.dot_dimension_numbers<[1], [0], [0], [1], [0, 0, 1, 1], [], []>} : vector<8x256xbf16>, vector<256x256xbf16>, vector<8x256xf32> -> vector<8x256xf32>
    %cst_10 = arith.constant dense<0.000000e+00> : vector<8x256xf32>
    %7 = tpu.matmul %3, %0, %cst_10 {dimension_numbers = #tpu.dot_dimension_numbers<[1], [0], [0], [1], [0, 0, 1, 1], [], []>} : vector<8x256xbf16>, vector<256x256xbf16>, vector<8x256xf32> -> vector<8x256xf32>
    %cst_11 = arith.constant dense<0.000000e+00> : vector<8x256xf32>
    %8 = tpu.matmul %3, %1, %cst_11 {dimension_numbers = #tpu.dot_dimension_numbers<[1], [0], [0], [1], [0, 0, 1, 1], [], []>} : vector<8x256xbf16>, vector<256x256xbf16>, vector<8x256xf32> -> vector<8x256xf32>
    %cst_12 = arith.constant dense<0.000000e+00> : vector<8x256xf32>
    %9 = tpu.matmul %4, %0, %cst_12 {dimension_numbers = #tpu.dot_dimension_numbers<[1], [0], [0], [1], [0, 0, 1, 1], [], []>} : vector<8x256xbf16>, vector<256x256xbf16>, vector<8x256xf32> -> vector<8x256xf32>
    %cst_13 = arith.constant dense<0.000000e+00> : vector<8x256xf32>
    %10 = tpu.matmul %4, %1, %cst_13 {dimension_numbers = #tpu.dot_dimension_numbers<[1], [0], [0], [1], [0, 0, 1, 1], [], []>} : vector<8x256xbf16>, vector<256x256xbf16>, vector<8x256xf32> -> vector<8x256xf32>
    %c0_14 = arith.constant 0 : index
    %c0_15 = arith.constant 0 : index
    %11 = vector.load %arg6[%c0_14, %c0_15] : memref<1x256xf32, #tpu.memory_space<vmem>>, vector<1x256xf32>
    %c0_16 = arith.constant 0 : index
    %c0_17 = arith.constant 0 : index
    %12 = vector.load %arg7[%c0_16, %c0_17] : memref<1x256xf32, #tpu.memory_space<vmem>>, vector<1x256xf32>
    %c0_18 = arith.constant 0 : index
    %c0_19 = arith.constant 0 : index
    %13 = vector.load %arg8[%c0_18, %c0_19] : memref<1x256xf32, #tpu.memory_space<vmem>>, vector<1x256xf32>
    %14 = vector.broadcast %13 : vector<1x256xf32> to vector<8x256xf32>
    %15 = arith.mulf %14, %5 : vector<8x256xf32>
    %16 = vector.broadcast %11 : vector<1x256xf32> to vector<8x256xf32>
    %17 = arith.mulf %16, %7 : vector<8x256xf32>
    %18 = arith.subf %15, %17 : vector<8x256xf32>
    %19 = arith.mulf %18, %18 : vector<8x256xf32>
    %20 = arith.subf %6, %8 : vector<8x256xf32>
    %21 = arith.mulf %20, %20 : vector<8x256xf32>
    %22 = arith.addf %19, %21 : vector<8x256xf32>
    %23 = vector.broadcast %12 : vector<1x256xf32> to vector<8x256xf32>
    %24 = arith.mulf %23, %9 : vector<8x256xf32>
    %25 = arith.subf %15, %24 : vector<8x256xf32>
    %26 = arith.mulf %25, %25 : vector<8x256xf32>
    %27 = arith.subf %6, %10 : vector<8x256xf32>
    %28 = arith.mulf %27, %27 : vector<8x256xf32>
    %29 = arith.addf %26, %28 : vector<8x256xf32>
    %30 = math.sqrt %22 : vector<8x256xf32>
    %31 = math.sqrt %29 : vector<8x256xf32>
    %cst_20 = arith.constant dense<0xFF800000> : vector<8xf32>
    %32 = vector.multi_reduction <maximumf>, %30, %cst_20 [1] : vector<8x256xf32> to vector<8xf32>
    %33 = vector.shape_cast %32 : vector<8xf32> to vector<8x1xf32>
    %cst_21 = arith.constant dense<0xFF800000> : vector<8xf32>
    %34 = vector.multi_reduction <maximumf>, %31, %cst_21 [1] : vector<8x256xf32> to vector<8xf32>
    %35 = vector.shape_cast %34 : vector<8xf32> to vector<8x1xf32>
    %36 = tpu.reciprocal %33 {approx = true} : vector<8x1xf32> -> vector<8x1xf32>
    %37 = vector.broadcast %36 : vector<8x1xf32> to vector<8x256xf32>
    %38 = arith.mulf %30, %37 : vector<8x256xf32>
    %39 = tpu.reciprocal %35 {approx = true} : vector<8x1xf32> -> vector<8x1xf32>
    %40 = vector.broadcast %39 : vector<8x1xf32> to vector<8x256xf32>
    %41 = arith.mulf %31, %40 : vector<8x256xf32>
    %42 = arith.cmpf one, %38, %38 : vector<8x256xf32>
    %cst_22 = arith.constant 0.000000e+00 : f32
    %43 = vector.broadcast %cst_22 : f32 to vector<8x256xf32>
    %44 = arith.select %42, %43, %38 : vector<8x256xi1>, vector<8x256xf32>
    %cst_23 = arith.constant 0.000000e+00 : f32
    %cst_24 = arith.constant 1.000000e+00 : f32
    %45 = vector.broadcast %cst_23 : f32 to vector<8x256xf32>
    %46 = arith.maximumf %45, %44 : vector<8x256xf32>
    %47 = vector.broadcast %cst_24 : f32 to vector<8x256xf32>
    %48 = arith.minimumf %47, %46 : vector<8x256xf32>
    %49 = arith.cmpf one, %41, %41 : vector<8x256xf32>
    %cst_25 = arith.constant 0.000000e+00 : f32
    %50 = vector.broadcast %cst_25 : f32 to vector<8x256xf32>
    %51 = arith.select %49, %50, %41 : vector<8x256xi1>, vector<8x256xf32>
    %cst_26 = arith.constant 0.000000e+00 : f32
    %cst_27 = arith.constant 1.000000e+00 : f32
    %52 = vector.broadcast %cst_26 : f32 to vector<8x256xf32>
    %53 = arith.maximumf %52, %51 : vector<8x256xf32>
    %54 = vector.broadcast %cst_27 : f32 to vector<8x256xf32>
    %55 = arith.minimumf %54, %53 : vector<8x256xf32>
    %56 = arith.mulf %48, %22 : vector<8x256xf32>
    %57 = arith.mulf %55, %29 : vector<8x256xf32>
    %58 = arith.addf %56, %57 : vector<8x256xf32>
    %59 = arith.addf %48, %55 : vector<8x256xf32>
    %60 = tpu.reciprocal %59 {approx = true} : vector<8x256xf32> -> vector<8x256xf32>
    %61 = arith.mulf %58, %60 : vector<8x256xf32>
    %c8_i32 = arith.constant 8 : i32
    %62 = arith.muli %arg0, %c8_i32 : i32
    %63 = tpu.iota {dimensions = array<i32: 0>} : vector<8x1xi32>
    %64 = vector.broadcast %62 : i32 to vector<8x1xi32>
    %65 = arith.addi %64, %63 : vector<8x1xi32>
    %c2_i32 = arith.constant 2 : i32
    %66 = vector.broadcast %c2_i32 : i32 to vector<8x1xi32>
    %67 = arith.cmpi slt, %65, %66 : vector<8x1xi32>
    %cst_28 = arith.constant 0.000000e+00 : f32
    %68 = vector.shape_cast %67 : vector<8x1xi1> to vector<8x1xi1>
    %69 = vector.broadcast %68 : vector<8x1xi1> to vector<8x256xi1>
    %70 = vector.broadcast %cst_28 : f32 to vector<8x256xf32>
    %71 = arith.select %69, %61, %70 : vector<8x256xi1>, vector<8x256xf32>
    %72 = vector.shape_cast %71 : vector<8x256xf32> to vector<1x8x256xf32>
    %cst_29 = arith.constant dense<0.000000e+00> : vector<8x256xf32>
    %73 = vector.multi_reduction <add>, %72, %cst_29 [0] : vector<1x8x256xf32> to vector<8x256xf32>
    %c0_30 = arith.constant 0 : index
    %c0_31 = arith.constant 0 : index
    %c0_32 = arith.constant 0 : index
    %74 = vector.load %arg9[%c0_30, %c0_31, %c0_32] : memref<1x8x256xf32, #tpu.memory_space<vmem>>, vector<1x8x256xf32>
    %75 = vector.shape_cast %74 : vector<1x8x256xf32> to vector<8x256xf32>
    %76 = vector.shape_cast %73 : vector<8x256xf32> to vector<1x8x256xf32>
    tpu.vector_store %arg9[%c0_30, %c0_31, %c0_32], %76 {strides = array<i32>} : memref<1x8x256xf32, #tpu.memory_space<vmem>>, vector<1x8x256xf32>,
    return
  }
  func.func @transform_0(%arg0: i32) -> (i32, i32) {
    %c0_i32 = arith.constant 0 : i32
    %c0_i32_0 = arith.constant 0 : i32
    return %arg0, %c0_i32 : i32, i32
  }
  func.func @transform_1(%arg0: i32) -> (i32, i32) {
    %c0_i32 = arith.constant 0 : i32
    %c0_i32_0 = arith.constant 0 : i32
    return %arg0, %c0_i32 : i32, i32
  }
  func.func @transform_2(%arg0: i32) -> (i32, i32) {
    %c0_i32 = arith.constant 0 : i32
    %c0_i32_0 = arith.constant 0 : i32
    return %arg0, %c0_i32 : i32, i32
  }
  func.func @transform_3(%arg0: i32) -> (i32, i32) {
    %c0_i32 = arith.constant 0 : i32
    %c0_i32_0 = arith.constant 0 : i32
    %c0_i32_1 = arith.constant 0 : i32
    return %c0_i32, %c0_i32_0 : i32, i32
  }
  func.func @transform_4(%arg0: i32) -> (i32, i32) {
    %c0_i32 = arith.constant 0 : i32
    %c0_i32_0 = arith.constant 0 : i32
    %c0_i32_1 = arith.constant 0 : i32
    return %c0_i32, %c0_i32_0 : i32, i32
  }
  func.func @transform_5(%arg0: i32) -> (i32, i32) {
    %c0_i32 = arith.constant 0 : i32
    %c0_i32_0 = arith.constant 0 : i32
    %c0_i32_1 = arith.constant 0 : i32
    return %c0_i32, %c0_i32_0 : i32, i32
  }
  func.func @transform_6(%arg0: i32) -> (i32, i32) {
    %c0_i32 = arith.constant 0 : i32
    %c0_i32_0 = arith.constant 0 : i32
    %c0_i32_1 = arith.constant 0 : i32
    return %c0_i32, %c0_i32_0 : i32, i32
  }
  func.func @transform_7(%arg0: i32) -> (i32, i32) {
    %c0_i32 = arith.constant 0 : i32
    %c0_i32_0 = arith.constant 0 : i32
    %c0_i32_1 = arith.constant 0 : i32
    return %c0_i32, %c0_i32_0 : i32, i32
  }
  func.func @transform_8(%arg0: i32) -> (i32, i32, i32) {
    %c0_i32 = arith.constant 0 : i32
    %c0_i32_0 = arith.constant 0 : i32
    %c0_i32_1 = arith.constant 0 : i32
    return %arg0, %c0_i32, %c0_i32_0 : i32, i32, i32
  }
}

module attributes {stable_mosaic.version = 11 : i64} {
  func.func @_freq_kron_kernel(%arg0: i32, %arg1: memref<8x256xbf16, #tpu.memory_space<vmem>>, %arg2: memref<8x256xbf16, #tpu.memory_space<vmem>>, %arg3: memref<8x256xbf16, #tpu.memory_space<vmem>>, %arg4: memref<256x256xbf16, #tpu.memory_space<vmem>>, %arg5: memref<256x256xbf16, #tpu.memory_space<vmem>>, %arg6: memref<1x256xf32, #tpu.memory_space<vmem>>, %arg7: memref<1x256xf32, #tpu.memory_space<vmem>>, %arg8: memref<1x256xf32, #tpu.memory_space<vmem>>, %arg9: memref<1x8x256xf32, #tpu.memory_space<vmem>>) attributes {dimension_semantics = [#tpu.dimension_semantics<parallel>], iteration_bounds = array<i64: 1>, scalar_prefetch = 0 : i64, scratch_operands = 0 : i64, tpu.core_type = #tpu.core_type<tc>, window_params = [{transform_indices = @transform_0, window_bounds = array<i64: 8, 256>}, {transform_indices = @transform_1, window_bounds = array<i64: 8, 256>}, {transform_indices = @transform_2, window_bounds = array<i64: 8, 256>}, {pipeline_mode = #tpu.pipeline_mode<synchronous>, transform_indices = @transform_3, window_bounds = array<i64: 256, 256>}, {pipeline_mode = #tpu.pipeline_mode<synchronous>, transform_indices = @transform_4, window_bounds = array<i64: 256, 256>}, {pipeline_mode = #tpu.pipeline_mode<synchronous>, transform_indices = @transform_5, window_bounds = array<i64: 1, 256>}, {pipeline_mode = #tpu.pipeline_mode<synchronous>, transform_indices = @transform_6, window_bounds = array<i64: 1, 256>}, {pipeline_mode = #tpu.pipeline_mode<synchronous>, transform_indices = @transform_7, window_bounds = array<i64: 1, 256>}, {transform_indices = @transform_8, window_bounds = array<i64: 1, 8, 256>}]} {
    %c0 = arith.constant 0 : index
    %c0_0 = arith.constant 0 : index
    %0 = vector.load %arg4[%c0, %c0_0] : memref<256x256xbf16, #tpu.memory_space<vmem>>, vector<256x256xbf16>
    %c0_1 = arith.constant 0 : index
    %c0_2 = arith.constant 0 : index
    %1 = vector.load %arg5[%c0_1, %c0_2] : memref<256x256xbf16, #tpu.memory_space<vmem>>, vector<256x256xbf16>
    %c0_3 = arith.constant 0 : index
    %c0_4 = arith.constant 0 : index
    %2 = vector.load %arg1[%c0_3, %c0_4] : memref<8x256xbf16, #tpu.memory_space<vmem>>, vector<8x256xbf16>
    %c0_5 = arith.constant 0 : index
    %c0_6 = arith.constant 0 : index
    %3 = vector.load %arg2[%c0_5, %c0_6] : memref<8x256xbf16, #tpu.memory_space<vmem>>, vector<8x256xbf16>
    %c0_7 = arith.constant 0 : index
    %c0_8 = arith.constant 0 : index
    %4 = vector.load %arg3[%c0_7, %c0_8] : memref<8x256xbf16, #tpu.memory_space<vmem>>, vector<8x256xbf16>
    %cst = arith.constant dense<0.000000e+00> : vector<8x256xf32>
    %5 = tpu.matmul %2, %0, %cst {dimension_numbers = #tpu.dot_dimension_numbers<[1], [0], [0], [1], [0, 0, 1, 1], [], []>} : vector<8x256xbf16>, vector<256x256xbf16>, vector<8x256xf32> -> vector<8x256xf32>
    %cst_9 = arith.constant dense<0.000000e+00> : vector<8x256xf32>
    %6 = tpu.matmul %2, %1, %cst_9 {dimension_numbers = #tpu.dot_dimension_numbers<[1], [0], [0], [1], [0, 0, 1, 1], [], []>} : vector<8x256xbf16>, vector<256x256xbf16>, vector<8x256xf32> -> vector<8x256xf32>
    %cst_10 = arith.constant dense<0.000000e+00> : vector<8x256xf32>
    %7 = tpu.matmul %3, %0, %cst_10 {dimension_numbers = #tpu.dot_dimension_numbers<[1], [0], [0], [1], [0, 0, 1, 1], [], []>} : vector<8x256xbf16>, vector<256x256xbf16>, vector<8x256xf32> -> vector<8x256xf32>
    %cst_11 = arith.constant dense<0.000000e+00> : vector<8x256xf32>
    %8 = tpu.matmul %3, %1, %cst_11 {dimension_numbers = #tpu.dot_dimension_numbers<[1], [0], [0], [1], [0, 0, 1, 1], [], []>} : vector<8x256xbf16>, vector<256x256xbf16>, vector<8x256xf32> -> vector<8x256xf32>
    %cst_12 = arith.constant dense<0.000000e+00> : vector<8x256xf32>
    %9 = tpu.matmul %4, %0, %cst_12 {dimension_numbers = #tpu.dot_dimension_numbers<[1], [0], [0], [1], [0, 0, 1, 1], [], []>} : vector<8x256xbf16>, vector<256x256xbf16>, vector<8x256xf32> -> vector<8x256xf32>
    %cst_13 = arith.constant dense<0.000000e+00> : vector<8x256xf32>
    %10 = tpu.matmul %4, %1, %cst_13 {dimension_numbers = #tpu.dot_dimension_numbers<[1], [0], [0], [1], [0, 0, 1, 1], [], []>} : vector<8x256xbf16>, vector<256x256xbf16>, vector<8x256xf32> -> vector<8x256xf32>
    %c0_14 = arith.constant 0 : index
    %c0_15 = arith.constant 0 : index
    %11 = vector.load %arg6[%c0_14, %c0_15] : memref<1x256xf32, #tpu.memory_space<vmem>>, vector<1x256xf32>
    %c0_16 = arith.constant 0 : index
    %c0_17 = arith.constant 0 : index
    %12 = vector.load %arg7[%c0_16, %c0_17] : memref<1x256xf32, #tpu.memory_space<vmem>>, vector<1x256xf32>
    %c0_18 = arith.constant 0 : index
    %c0_19 = arith.constant 0 : index
    %13 = vector.load %arg8[%c0_18, %c0_19] : memref<1x256xf32, #tpu.memory_space<vmem>>, vector<1x256xf32>
    %14 = vector.broadcast %13 : vector<1x256xf32> to vector<8x256xf32>
    %15 = arith.mulf %14, %5 : vector<8x256xf32>
    %16 = vector.broadcast %11 : vector<1x256xf32> to vector<8x256xf32>
    %17 = arith.mulf %16, %7 : vector<8x256xf32>
    %18 = arith.subf %15, %17 : vector<8x256xf32>
    %19 = arith.mulf %18, %18 : vector<8x256xf32>
    %20 = arith.subf %6, %8 : vector<8x256xf32>
    %21 = arith.mulf %20, %20 : vector<8x256xf32>
    %22 = arith.addf %19, %21 : vector<8x256xf32>
    %23 = vector.broadcast %12 : vector<1x256xf32> to vector<8x256xf32>
    %24 = arith.mulf %23, %9 : vector<8x256xf32>
    %25 = arith.subf %15, %24 : vector<8x256xf32>
    %26 = arith.mulf %25, %25 : vector<8x256xf32>
    %27 = arith.subf %6, %10 : vector<8x256xf32>
    %28 = arith.mulf %27, %27 : vector<8x256xf32>
    %29 = arith.addf %26, %28 : vector<8x256xf32>
    %30 = math.sqrt %22 : vector<8x256xf32>
    %31 = math.sqrt %29 : vector<8x256xf32>
    %cst_20 = arith.constant dense<0xFF800000> : vector<8xf32>
    %32 = vector.multi_reduction <maximumf>, %30, %cst_20 [1] : vector<8x256xf32> to vector<8xf32>
    %33 = vector.shape_cast %32 : vector<8xf32> to vector<8x1xf32>
    %cst_21 = arith.constant dense<0xFF800000> : vector<8xf32>
    %34 = vector.multi_reduction <maximumf>, %31, %cst_21 [1] : vector<8x256xf32> to vector<8xf32>
    %35 = vector.shape_cast %34 : vector<8xf32> to vector<8x1xf32>
    %36 = tpu.reciprocal %33 {approx = true} : vector<8x1xf32> -> vector<8x1xf32>
    %37 = vector.broadcast %36 : vector<8x1xf32> to vector<8x256xf32>
    %38 = arith.mulf %30, %37 : vector<8x256xf32>
    %39 = tpu.reciprocal %35 {approx = true} : vector<8x1xf32> -> vector<8x1xf32>
    %40 = vector.broadcast %39 : vector<8x1xf32> to vector<8x256xf32>
    %41 = arith.mulf %31, %40 : vector<8x256xf32>
    %42 = arith.cmpf one, %38, %38 : vector<8x256xf32>
    %cst_22 = arith.constant 0.000000e+00 : f32
    %43 = vector.broadcast %cst_22 : f32 to vector<8x256xf32>
    %44 = arith.select %42, %43, %38 : vector<8x256xi1>, vector<8x256xf32>
    %cst_23 = arith.constant 0.000000e+00 : f32
    %cst_24 = arith.constant 1.000000e+00 : f32
    %45 = vector.broadcast %cst_23 : f32 to vector<8x256xf32>
    %46 = arith.maximumf %45, %44 : vector<8x256xf32>
    %47 = vector.broadcast %cst_24 : f32 to vector<8x256xf32>
    %48 = arith.minimumf %47, %46 : vector<8x256xf32>
    %49 = arith.cmpf one, %41, %41 : vector<8x256xf32>
    %cst_25 = arith.constant 0.000000e+00 : f32
    %50 = vector.broadcast %cst_25 : f32 to vector<8x256xf32>
    %51 = arith.select %49, %50, %41 : vector<8x256xi1>, vector<8x256xf32>
    %cst_26 = arith.constant 0.000000e+00 : f32
    %cst_27 = arith.constant 1.000000e+00 : f32
    %52 = vector.broadcast %cst_26 : f32 to vector<8x256xf32>
    %53 = arith.maximumf %52, %51 : vector<8x256xf32>
    %54 = vector.broadcast %cst_27 : f32 to vector<8x256xf32>
    %55 = arith.minimumf %54, %53 : vector<8x256xf32>
    %56 = arith.mulf %48, %22 : vector<8x256xf32>
    %57 = arith.mulf %55, %29 : vector<8x256xf32>
    %58 = arith.addf %56, %57 : vector<8x256xf32>
    %59 = arith.addf %48, %55 : vector<8x256xf32>
    %60 = tpu.reciprocal %59 {approx = true} : vector<8x256xf32> -> vector<8x256xf32>
    %61 = arith.mulf %58, %60 : vector<8x256xf32>
    %c8_i32 = arith.constant 8 : i32
    %62 = arith.muli %arg0, %c8_i32 : i32
    %63 = tpu.iota {dimensions = array<i32: 0>} : vector<8x1xi32>
    %64 = vector.broadcast %62 : i32 to vector<8x1xi32>
    %65 = arith.addi %64, %63 : vector<8x1xi32>
    %c2_i32 = arith.constant 2 : i32
    %66 = vector.broadcast %c2_i32 : i32 to vector<8x1xi32>
    %67 = arith.cmpi slt, %65, %66 : vector<8x1xi32>
    %cst_28 = arith.constant 0.000000e+00 : f32
    %68 = vector.shape_cast %67 : vector<8x1xi1> to vector<8x1xi1>
    %69 = vector.broadcast %68 : vector<8x1xi1> to vector<8x256xi1>
    %70 = vector.broadcast %cst_28 : f32 to vector<8x256xf32>
    %71 = arith.select %69, %61, %70 : vector<8x256xi1>, vector<8x256xf32>
    %72 = vector.shape_cast %71 : vector<8x256xf32> to vector<1x8x256xf32>
    %cst_29 = arith.constant dense<0.000000e+00> : vector<8x256xf32>
    %73 = vector.multi_reduction <add>, %72, %cst_29 [0] : vector<1x8x256xf32> to vector<8x256xf32>
    %c0_30 = arith.constant 0 : index
    %c0_31 = arith.constant 0 : index
    %c0_32 = arith.constant 0 : index
    %74 = vector.load %arg9[%c0_30, %c0_31, %c0_32] : memref<1x8x256xf32, #tpu.memory_space<vmem>>, vector<1x8x256xf32>
    %75 = vector.shape_cast %74 : vector<1x8x256xf32> to vector<8x256xf32>
    %76 = vector.shape_cast %73 : vector<8x256xf32> to vector<1x8x256xf32>
    tpu.vector_store %arg9[%c0_30, %c0_31, %c0_32], %76 {strides = array<i32>} : memref<1x8x256xf32, #tpu.memory_space<vmem>>, vector<1x8x256xf32>,
    return
  }
  func.func @transform_0(%arg0: i32) -> (i32, i32) {
    %c0_i32 = arith.constant 0 : i32
    %c0_i32_0 = arith.constant 0 : i32
    return %arg0, %c0_i32 : i32, i32
  }
  func.func @transform_1(%arg0: i32) -> (i32, i32) {
    %c0_i32 = arith.constant 0 : i32
    %c0_i32_0 = arith.constant 0 : i32
    return %arg0, %c0_i32 : i32, i32
  }
  func.func @transform_2(%arg0: i32) -> (i32, i32) {
    %c0_i32 = arith.constant 0 : i32
    %c0_i32_0 = arith.constant 0 : i32
    return %arg0, %c0_i32 : i32, i32
  }
  func.func @transform_3(%arg0: i32) -> (i32, i32) {
    %c0_i32 = arith.constant 0 : i32
    %c0_i32_0 = arith.constant 0 : i32
    %c0_i32_1 = arith.constant 0 : i32
    return %c0_i32, %c0_i32_0 : i32, i32
  }
  func.func @transform_4(%arg0: i32) -> (i32, i32) {
    %c0_i32 = arith.constant 0 : i32
    %c0_i32_0 = arith.constant 0 : i32
    %c0_i32_1 = arith.constant 0 : i32
    return %c0_i32, %c0_i32_0 : i32, i32
  }
  func.func @transform_5(%arg0: i32) -> (i32, i32) {
    %c0_i32 = arith.constant 0 : i32
    %c0_i32_0 = arith.constant 0 : i32
    %c0_i32_1 = arith.constant 0 : i32
    return %c0_i32, %c0_i32_0 : i32, i32
  }
  func.func @transform_6(%arg0: i32) -> (i32, i32) {
    %c0_i32 = arith.constant 0 : i32
    %c0_i32_0 = arith.constant 0 : i32
    %c0_i32_1 = arith.constant 0 : i32
    return %c0_i32, %c0_i32_0 : i32, i32
  }
  func.func @transform_7(%arg0: i32) -> (i32, i32) {
    %c0_i32 = arith.constant 0 : i32
    %c0_i32_0 = arith.constant 0 : i32
    %c0_i32_1 = arith.constant 0 : i32
    return %c0_i32, %c0_i32_0 : i32, i32
  }
  func.func @transform_8(%arg0: i32) -> (i32, i32, i32) {
    %c0_i32 = arith.constant 0 : i32
    %c0_i32_0 = arith.constant 0 : i32
    %c0_i32_1 = arith.constant 0 : i32
    return %arg0, %c0_i32, %c0_i32_0 : i32, i32, i32
  }
}

</mosaic_0001>

<llo_original>
// kernel: tpu_custom_call.1
$region0: #{tpu_custom_call.1}
  #allocation0 [shape = 'u32[]', space=smem, size = 0x4, offset = 0x4, fixed_abs, tag = 'smem constant byte address 0x4 - core index']
  #allocation1 [shape = 'u32[144,128]{1,0:T(1,128)}', space=vmem, size = 0x12000, scoped, tag = 'internal scratch']
  %s0 = inlined_call_operand.hbm [shape: bf16[8,256], index: 0, kind: input, shape index: {}]
  %s1 = inlined_call_operand.hbm [shape: bf16[8,256], index: 1, kind: input, shape index: {}]
  %s2 = inlined_call_operand.hbm [shape: bf16[8,256], index: 2, kind: input, shape index: {}]
  %s3 = inlined_call_operand.hbm [shape: bf16[256,256], index: 3, kind: input, shape index: {}]
  %s4 = inlined_call_operand.hbm [shape: bf16[256,256], index: 4, kind: input, shape index: {}]
  %s5 = inlined_call_operand.vmem [shape: f32[1,256], index: 5, kind: input, shape index: {}]
  %s6 = inlined_call_operand.vmem [shape: f32[1,256], index: 6, kind: input, shape index: {}]
  %s7 = inlined_call_operand.vmem [shape: f32[1,256], index: 7, kind: input, shape index: {}]
  %s8 = inlined_call_operand.hbm [shape: f32[1,8,256], index: 8, kind: output, shape index: {}]
  %s9 = sld [smem:[#allocation0]]
  $region62: #{tpu_custom_call.1} parent=0
    _
  %s11 = ssub.s32 1, %s9
  %s12 = scalar_select 0, %s11, %s9
  $region1: #{tpu_custom_call.1} parent=0
    #allocation2 [shape = 'u8[4096]{0}', space=vmem, size = 0x1000, scoped, tag = 'input window, operand 0, single buffered']
    #allocation3 [shape = 's32[1]{0}', space=sflag, size = 0x4, scoped, tag = 'scoped memory for tpu_custom_call.1']
    #allocation4 [shape = 's32[1]{0}', space=sflag, size = 0x4, scoped, tag = 'scoped memory for tpu_custom_call.1']
    #allocation5 [shape = 'u8[4096]{0}', space=vmem, size = 0x1000, scoped, tag = 'input window, operand 1, single buffered']
    #allocation6 [shape = 's32[1]{0}', space=sflag, size = 0x4, scoped, tag = 'scoped memory for tpu_custom_call.1']
    #allocation7 [shape = 'u8[4096]{0}', space=vmem, size = 0x1000, scoped, tag = 'input window, operand 2, single buffered']
    #allocation8 [shape = 'u8[131072]{0}', space=vmem, size = 0x20000, scoped, tag = 'input window, operand 3, single buffered']
    #allocation9 [shape = 's32[1]{0}', space=sflag, size = 0x4, scoped, tag = 'scoped memory for tpu_custom_call.1']
    #allocation10 [shape = 'u8[131072]{0}', space=vmem, size = 0x20000, scoped, tag = 'input window, operand 4, single buffered']
    #allocation11 [shape = 'u8[8192]{0}', space=vmem, size = 0x2000, scoped, tag = 'output window, operand 0, single buffered']
    %13 = vsyncpa [#allocation3], 0
    %14 = vsyncpa [#allocation6], 0
    %15 = vsyncpa [#allocation9], 0
    %16 = vsyncpa [#allocation4], 0
    // Predicated region
    $region2: #{tpu_custom_call.1} parent=1 // pred_check
      _
    $region3: #{tpu_custom_call.1} parent=1 // pred_check_branch
      %18 = sbr.rel (0) target = $region5
    $region4: #{tpu_custom_call.1} parent=1 // pred_region
      %s20 = ssub.s32 128, 128
      %21 = vsyncadd [#allocation3], %s20
      %s23 = sshll.u32 [#allocation2], 4
      %s24 = int_to_ptr.vmem [resolvable:$true] %s23
      %26 = dma.hbm_to_vmem [thread:$0]  %s0, 128, %s24, [#allocation3]
    $region5: #{tpu_custom_call.1} parent=1 // pred_fallthru
      _
    // Predicated region
    $region6: #{tpu_custom_call.1} parent=1 // pred_check
      _
    $region7: #{tpu_custom_call.1} parent=1 // pred_check_branch
      %28 = sbr.rel (0) target = $region9
    $region8: #{tpu_custom_call.1} parent=1 // pred_region
      %s30 = ssub.s32 128, 128
      %31 = vsyncadd [#allocation6], %s30
      %s33 = sshll.u32 [#allocation5], 4
      %s34 = int_to_ptr.vmem [resolvable:$true] %s33
      %36 = dma.hbm_to_vmem [thread:$0]  %s1, 128, %s34, [#allocation6]
    $region9: #{tpu_custom_call.1} parent=1 // pred_fallthru
      _
    // Predicated region
    $region10: #{tpu_custom_call.1} parent=1 // pred_check
      _
    $region11: #{tpu_custom_call.1} parent=1 // pred_check_branch
      %38 = sbr.rel (0) target = $region13
    $region12: #{tpu_custom_call.1} parent=1 // pred_region
      %s40 = ssub.s32 128, 128
      %41 = vsyncadd [#allocation6], %s40
      %s43 = sshll.u32 [#allocation7], 4
      %s44 = int_to_ptr.vmem [resolvable:$true] %s43
      %46 = dma.hbm_to_vmem [thread:$0]  %s2, 128, %s44, [#allocation6]
    $region13: #{tpu_custom_call.1} parent=1 // pred_fallthru
      _
    // Predicated region
    $region14: #{tpu_custom_call.1} parent=1 // pred_check
      _
    $region15: #{tpu_custom_call.1} parent=1 // pred_check_branch
      %48 = sbr.rel (0) target = $region17
    $region16: #{tpu_custom_call.1} parent=1 // pred_region
      %s50 = ssub.s32 4096, 4096
      %51 = vsyncadd [#allocation9], %s50
      %s52 = sshll.u32 [#allocation8], 4
      %s53 = int_to_ptr.vmem [resolvable:$true] %s52
      %58 = dma.hbm_to_vmem [thread:$0]  %s3, 4096, %s53, [#allocation9], 128, 128, 8
    $region17: #{tpu_custom_call.1} parent=1 // pred_fallthru
      _
    // Predicated region
    $region18: #{tpu_custom_call.1} parent=1 // pred_check
      _
    $region19: #{tpu_custom_call.1} parent=1 // pred_check_branch
      %60 = sbr.rel (0) target = $region21
    $region20: #{tpu_custom_call.1} parent=1 // pred_region
      %s62 = ssub.s32 4096, 4096
      %63 = vsyncadd [#allocation9], %s62
      %s64 = sshll.u32 [#allocation10], 4
      %s65 = int_to_ptr.vmem [resolvable:$true] %s64
      %70 = dma.hbm_to_vmem [thread:$0]  %s4, 4096, %s65, [#allocation9], 128, 128, 8
    $region21: #{tpu_custom_call.1} parent=1 // pred_fallthru
      _
    // Predicated region
    $region22: #{tpu_custom_call.1} parent=1 // pred_check
      _
    $region23: #{tpu_custom_call.1} parent=1 // pred_check_branch
      %72 = sbr.rel (0) target = $region25
    $region24: #{tpu_custom_call.1} parent=1 // pred_region
      _
    $region25: #{tpu_custom_call.1} parent=1 // pred_fallthru
      _
    // Predicated region
    $region26: #{tpu_custom_call.1} parent=1 // pred_check
      _
    $region27: #{tpu_custom_call.1} parent=1 // pred_check_branch
      %74 = sbr.rel (0) target = $region29
    $region28: #{tpu_custom_call.1} parent=1 // pred_region
      _
    $region29: #{tpu_custom_call.1} parent=1 // pred_fallthru
      _
    // Predicated region
    $region30: #{tpu_custom_call.1} parent=1 // pred_check
      _
    $region31: #{tpu_custom_call.1} parent=1 // pred_check_branch
      %76 = sbr.rel (0) target = $region33
    $region32: #{tpu_custom_call.1} parent=1 // pred_region
      _
    $region33: #{tpu_custom_call.1} parent=1 // pred_fallthru
      _
    // Predicated region
    $region34: #{tpu_custom_call.1} parent=1 // pred_check
      _
    $region35: #{tpu_custom_call.1} parent=1 // pred_check_branch
      %78 = sbr.rel (0) target = $region37
    $region36: #{tpu_custom_call.1} parent=1 // pred_region
      %79 = dma.done [#allocation3], 128
    $region37: #{tpu_custom_call.1} parent=1 // pred_fallthru
      _
    // Predicated region
    $region38: #{tpu_custom_call.1} parent=1 // pred_check
      _
    $region39: #{tpu_custom_call.1} parent=1 // pred_check_branch
      %81 = sbr.rel (0) target = $region41
    $region40: #{tpu_custom_call.1} parent=1 // pred_region
      %82 = dma.done [#allocation6], 128
    $region41: #{tpu_custom_call.1} parent=1 // pred_fallthru
      _
    // Predicated region
    $region42: #{tpu_custom_call.1} parent=1 // pred_check
      _
    $region43: #{tpu_custom_call.1} parent=1 // pred_check_branch
      %84 = sbr.rel (0) target = $region45
    $region44: #{tpu_custom_call.1} parent=1 // pred_region
      %85 = dma.done [#allocation6], 128
    $region45: #{tpu_custom_call.1} parent=1 // pred_fallthru
      _
    // Predicated region
    $region46: #{tpu_custom_call.1} parent=1 // pred_check
      _
    $region47: #{tpu_custom_call.1} parent=1 // pred_check_branch
      %87 = sbr.rel (0) target = $region49
    $region48: #{tpu_custom_call.1} parent=1 // pred_region
      %88 = dma.done [#allocation9], 4096
    $region49: #{tpu_custom_call.1} parent=1 // pred_fallthru
      _
    // Predicated region
    $region50: #{tpu_custom_call.1} parent=1 // pred_check
      _
    $region51: #{tpu_custom_call.1} parent=1 // pred_check_branch
      %90 = sbr.rel (0) target = $region53
    $region52: #{tpu_custom_call.1} parent=1 // pred_region
      %91 = dma.done [#allocation9], 4096
    $region53: #{tpu_custom_call.1} parent=1 // pred_fallthru
      _
    %v92 = vld [vmem:[#allocation8] sm:$0xff]
    %v93 = vld [vmem:[#allocation8 + $0x8] sm:$0xff]
    %v94 = vld [vmem:[#allocation8 + $0x10] sm:$0xff]
    %v95 = vld [vmem:[#allocation8 + $0x18] sm:$0xff]
    %v96 = vld [vmem:[#allocation8 + $0x20] sm:$0xff]
    %v97 = vld [vmem:[#allocation8 + $0x28] sm:$0xff]
    %v98 = vld [vmem:[#allocation8 + $0x30] sm:$0xff]
    %v99 = vld [vmem:[#allocation8 + $0x38] sm:$0xff]
    %v100 = vld [vmem:[#allocation8 + $0x40] sm:$0xff]
    %v101 = vld [vmem:[#allocation8 + $0x48] sm:$0xff]
    %v102 = vld [vmem:[#allocation8 + $0x50] sm:$0xff]
    %v103 = vld [vmem:[#allocation8 + $0x58] sm:$0xff]
    %v104 = vld [vmem:[#allocation8 + $0x60] sm:$0xff]
    %v105 = vld [vmem:[#allocation8 + $0x68] sm:$0xff]
    %v106 = vld [vmem:[#allocation8 + $0x70] sm:$0xff]
    %v107 = vld [vmem:[#allocation8 + $0x78] sm:$0xff]
    %v108 = vld [vmem:[#allocation8 + $0x80] sm:$0xff]
    %v109 = vld [vmem:[#allocation8 + $0x88] sm:$0xff]
    %v110 = vld [vmem:[#allocation8 + $0x90] sm:$0xff]
    %v111 = vld [vmem:[#allocation8 + $0x98] sm:$0xff]
    %v112 = vld [vmem:[#allocation8 + $0xa0] sm:$0xff]
    %v113 = vld [vmem:[#allocation8 + $0xa8] sm:$0xff]
    %v114 = vld [vmem:[#allocation8 + $0xb0] sm:$0xff]
    %v115 = vld [vmem:[#allocation8 + $0xb8] sm:$0xff]
    %v116 = vld [vmem:[#allocation8 + $0xc0] sm:$0xff]
    %v117 = vld [vmem:[#allocation8 + $0xc8] sm:$0xff]
    %v118 = vld [vmem:[#allocation8 + $0xd0] sm:$0xff]
    %v119 = vld [vmem:[#allocation8 + $0xd8] sm:$0xff]
    %v120 = vld [vmem:[#allocation8 + $0xe0] sm:$0xff]
    %v121 = vld [vmem:[#allocation8 + $0xe8] sm:$0xff]
    %v122 = vld [vmem:[#allocation8 + $0xf0] sm:$0xff]
    %v123 = vld [vmem:[#allocation8 + $0xf8] sm:$0xff]
    %v124 = vld [vmem:[#allocation10] sm:$0xff]
    %v125 = vld [vmem:[#allocation10 + $0x8] sm:$0xff]
    %v126 = vld [vmem:[#allocation10 + $0x10] sm:$0xff]
    %v127 = vld [vmem:[#allocation10 + $0x18] sm:$0xff]
    %v128 = vld [vmem:[#allocation10 + $0x20] sm:$0xff]
    %v129 = vld [vmem:[#allocation10 + $0x28] sm:$0xff]
    %v130 = vld [vmem:[#allocation10 + $0x30] sm:$0xff]
    %v131 = vld [vmem:[#allocation10 + $0x38] sm:$0xff]
    %v132 = vld [vmem:[#allocation10 + $0x40] sm:$0xff]
    %v133 = vld [vmem:[#allocation10 + $0x48] sm:$0xff]
    %v134 = vld [vmem:[#allocation10 + $0x50] sm:$0xff]
    %v135 = vld [vmem:[#allocation10 + $0x58] sm:$0xff]
    %v136 = vld [vmem:[#allocation10 + $0x60] sm:$0xff]
    %v137 = vld [vmem:[#allocation10 + $0x68] sm:$0xff]
    %v138 = vld [vmem:[#allocation10 + $0x70] sm:$0xff]
    %v139 = vld [vmem:[#allocation10 + $0x78] sm:$0xff]
    %v140 = vld [vmem:[#allocation10 + $0x80] sm:$0xff]
    %v141 = vld [vmem:[#allocation10 + $0x88] sm:$0xff]
    %v142 = vld [vmem:[#allocation10 + $0x90] sm:$0xff]
    %v143 = vld [vmem:[#allocation10 + $0x98] sm:$0xff]
    %v144 = vld [vmem:[#allocation10 + $0xa0] sm:$0xff]
    %v145 = vld [vmem:[#allocation10 + $0xa8] sm:$0xff]
    %v146 = vld [vmem:[#allocation10 + $0xb0] sm:$0xff]
    %v147 = vld [vmem:[#allocation10 + $0xb8] sm:$0xff]
    %v148 = vld [vmem:[#allocation10 + $0xc0] sm:$0xff]
    %v149 = vld [vmem:[#allocation10 + $0xc8] sm:$0xff]
    %v150 = vld [vmem:[#allocation10 + $0xd0] sm:$0xff]
    %v151 = vld [vmem:[#allocation10 + $0xd8] sm:$0xff]
    %v152 = vld [vmem:[#allocation10 + $0xe0] sm:$0xff]
    %v153 = vld [vmem:[#allocation10 + $0xe8] sm:$0xff]
    %v154 = vld [vmem:[#allocation10 + $0xf0] sm:$0xff]
    %v155 = vld [vmem:[#allocation10 + $0xf8] sm:$0xff]
    %v156 = vld [vmem:[#allocation2] sm:$0xff]
    %v157 = vld [vmem:[#allocation5] sm:$0xff]
    %v158 = vld [vmem:[#allocation7] sm:$0xff]
    %v160 = vunpack.c.l.b16 %v156
    %v161 = vunpack.c.h.b16 %v156
    %v162 = vpack.c.b16 %v160, %v160
    %v163 = vpack.c.b16 %v161, %v161
    %v198 = vunpack.c.l.b16 %v92
    %v199 = vunpack.c.h.b16 %v92
    %v200 = vunpack.c.l.b16 %v93
    %v201 = vunpack.c.h.b16 %v93
    %v202 = vunpack.c.l.b16 %v94
    %v203 = vunpack.c.h.b16 %v94
    %v204 = vunpack.c.l.b16 %v95
    %v205 = vunpack.c.h.b16 %v95
    %v206 = vunpack.c.l.b16 %v96
    %v207 = vunpack.c.h.b16 %v96
    %v208 = vunpack.c.l.b16 %v97
    %v209 = vunpack.c.h.b16 %v97
    %v210 = vunpack.c.l.b16 %v98
    %v211 = vunpack.c.h.b16 %v98
    %v212 = vunpack.c.l.b16 %v99
    %v213 = vunpack.c.h.b16 %v99
    %v214 = vunpack.c.l.b16 %v100
    %v215 = vunpack.c.h.b16 %v100
    %v216 = vunpack.c.l.b16 %v101
    %v217 = vunpack.c.h.b16 %v101
    %v218 = vunpack.c.l.b16 %v102
    %v219 = vunpack.c.h.b16 %v102
    %v220 = vunpack.c.l.b16 %v103
    %v221 = vunpack.c.h.b16 %v103
    %v222 = vunpack.c.l.b16 %v104
    %v223 = vunpack.c.h.b16 %v104
    %v224 = vunpack.c.l.b16 %v105
    %v225 = vunpack.c.h.b16 %v105
    %v226 = vunpack.c.l.b16 %v106
    %v227 = vunpack.c.h.b16 %v106
    %v228 = vunpack.c.l.b16 %v107
    %v229 = vunpack.c.h.b16 %v107
    %v230 = vunpack.c.l.b16 %v108
    %v231 = vunpack.c.h.b16 %v108
    %v232 = vunpack.c.l.b16 %v109
    %v233 = vunpack.c.h.b16 %v109
    %v234 = vunpack.c.l.b16 %v110
    %v235 = vunpack.c.h.b16 %v110
    %v236 = vunpack.c.l.b16 %v111
    %v237 = vunpack.c.h.b16 %v111
    %v238 = vunpack.c.l.b16 %v112
    %v239 = vunpack.c.h.b16 %v112
    %v240 = vunpack.c.l.b16 %v113
    %v241 = vunpack.c.h.b16 %v113
    %v242 = vunpack.c.l.b16 %v114
    %v243 = vunpack.c.h.b16 %v114
    %v244 = vunpack.c.l.b16 %v115
    %v245 = vunpack.c.h.b16 %v115
    %v246 = vunpack.c.l.b16 %v116
    %v247 = vunpack.c.h.b16 %v116
    %v248 = vunpack.c.l.b16 %v117
    %v249 = vunpack.c.h.b16 %v117
    %v250 = vunpack.c.l.b16 %v118
    %v251 = vunpack.c.h.b16 %v118
    %v252 = vunpack.c.l.b16 %v119
    %v253 = vunpack.c.h.b16 %v119
    %v254 = vunpack.c.l.b16 %v120
    %v255 = vunpack.c.h.b16 %v120
    %v256 = vunpack.c.l.b16 %v121
    %v257 = vunpack.c.h.b16 %v121
    %v258 = vunpack.c.l.b16 %v122
    %v259 = vunpack.c.h.b16 %v122
    %v260 = vunpack.c.l.b16 %v123
    %v261 = vunpack.c.h.b16 %v123
    %v262 = vpack.c.b16 %v200, %v198
    %v263 = vpack.c.b16 %v201, %v199
    %v264 = vpack.c.b16 %v204, %v202
    %v265 = vpack.c.b16 %v205, %v203
    %v266 = vpack.c.b16 %v208, %v206
    %v267 = vpack.c.b16 %v209, %v207
    %v268 = vpack.c.b16 %v212, %v210
    %v269 = vpack.c.b16 %v213, %v211
    %v270 = vpack.c.b16 %v216, %v214
    %v271 = vpack.c.b16 %v217, %v215
    %v272 = vpack.c.b16 %v220, %v218
    %v273 = vpack.c.b16 %v221, %v219
    %v274 = vpack.c.b16 %v224, %v222
    %v275 = vpack.c.b16 %v225, %v223
    %v276 = vpack.c.b16 %v228, %v226
    %v277 = vpack.c.b16 %v229, %v227
    %v278 = vpack.c.b16 %v232, %v230
    %v279 = vpack.c.b16 %v233, %v231
    %v280 = vpack.c.b16 %v236, %v234
    %v281 = vpack.c.b16 %v237, %v235
    %v282 = vpack.c.b16 %v240, %v238
    %v283 = vpack.c.b16 %v241, %v239
    %v284 = vpack.c.b16 %v244, %v242
    %v285 = vpack.c.b16 %v245, %v243
    %v286 = vpack.c.b16 %v248, %v246
    %v287 = vpack.c.b16 %v249, %v247
    %v288 = vpack.c.b16 %v252, %v250
    %v289 = vpack.c.b16 %v253, %v251
    %v290 = vpack.c.b16 %v256, %v254
    %v291 = vpack.c.b16 %v257, %v255
    %v292 = vpack.c.b16 %v260, %v258
    %v293 = vpack.c.b16 %v261, %v259
    %326 = vmatprep.subr.bf16.mxu0 %v263
    %327 = vmatpush1.bf16.msra.mxu0 %v262
    %328 = vmatprep.subr.bf16.mxu0 %v265
    %329 = vmatpush1.bf16.msra.mxu0 %v264
    %330 = vmatprep.subr.bf16.mxu0 %v267
    %331 = vmatpush1.bf16.msra.mxu0 %v266
    %332 = vmatprep.subr.bf16.mxu0 %v269
    %333 = vmatpush1.bf16.msra.mxu0 %v268
    %334 = vmatprep.subr.bf16.mxu0 %v271
    %335 = vmatpush1.bf16.msra.mxu0 %v270
    %336 = vmatprep.subr.bf16.mxu0 %v273
    %337 = vmatpush1.bf16.msra.mxu0 %v272
    %338 = vmatprep.subr.bf16.mxu0 %v275
    %339 = vmatpush1.bf16.msra.mxu0 %v274
    %340 = vmatprep.subr.bf16.mxu0 %v277
    %341 = vmatpush1.bf16.msra.mxu0 %v276
    %342 = vmatprep.subr.bf16.mxu0 %v279
    %343 = vmatpush1.bf16.msra.mxu0 %v278
    %344 = vmatprep.subr.bf16.mxu0 %v281
    %345 = vmatpush1.bf16.msra.mxu0 %v280
    %346 = vmatprep.subr.bf16.mxu0 %v283
    %347 = vmatpush1.bf16.msra.mxu0 %v282
    %348 = vmatprep.subr.bf16.mxu0 %v285
    %349 = vmatpush1.bf16.msra.mxu0 %v284
    %350 = vmatprep.subr.bf16.mxu0 %v287
    %351 = vmatpush1.bf16.msra.mxu0 %v286
    %352 = vmatprep.subr.bf16.mxu0 %v289
    %353 = vmatpush1.bf16.msra.mxu0 %v288
    %354 = vmatprep.subr.bf16.mxu0 %v291
    %355 = vmatpush1.bf16.msra.mxu0 %v290
    %356 = vmatprep.subr.bf16.mxu0 %v293
    %357 = vmatpush1.bf16.msra.mxu0 %v292
    %358 = vmatprep.mubr.bf16.mxu0 %v163
    %359 = vmatmul.mubr.bf16.gmra.mrb[0].mxu0 %v162
    %v360 = vpop.f32.mrb[0].mxu0
    %v361 = vadd.f32 0.0, %v360
    %v362 = vpop.f32.mrb[0].mxu0
    %v363 = vadd.f32 0.0, %v362
    %v364 = vpop.f32.mrb[0].mxu0
    %v365 = vpop.f32.mrb[0].mxu0
    %366 = vdwg.mxu0
    %v399 = vunpack.c.l.b16 %v124
    %v400 = vunpack.c.h.b16 %v124
    %v401 = vunpack.c.l.b16 %v125
    %v402 = vunpack.c.h.b16 %v125
    %v403 = vunpack.c.l.b16 %v126
    %v404 = vunpack.c.h.b16 %v126
    %v405 = vunpack.c.l.b16 %v127
    %v406 = vunpack.c.h.b16 %v127
    %v407 = vunpack.c.l.b16 %v128
    %v408 = vunpack.c.h.b16 %v128
    %v409 = vunpack.c.l.b16 %v129
    %v410 = vunpack.c.h.b16 %v129
    %v411 = vunpack.c.l.b16 %v130
    %v412 = vunpack.c.h.b16 %v130
    %v413 = vunpack.c.l.b16 %v131
    %v414 = vunpack.c.h.b16 %v131
    %v415 = vunpack.c.l.b16 %v132
    %v416 = vunpack.c.h.b16 %v132
    %v417 = vunpack.c.l.b16 %v133
    %v418 = vunpack.c.h.b16 %v133
    %v419 = vunpack.c.l.b16 %v134
    %v420 = vunpack.c.h.b16 %v134
    %v421 = vunpack.c.l.b16 %v135
    %v422 = vunpack.c.h.b16 %v135
    %v423 = vunpack.c.l.b16 %v136
    %v424 = vunpack.c.h.b16 %v136
    %v425 = vunpack.c.l.b16 %v137
    %v426 = vunpack.c.h.b16 %v137
    %v427 = vunpack.c.l.b16 %v138
    %v428 = vunpack.c.h.b16 %v138
    %v429 = vunpack.c.l.b16 %v139
    %v430 = vunpack.c.h.b16 %v139
    %v431 = vunpack.c.l.b16 %v140
    %v432 = vunpack.c.h.b16 %v140
    %v433 = vunpack.c.l.b16 %v141
    %v434 = vunpack.c.h.b16 %v141
    %v435 = vunpack.c.l.b16 %v142
    %v436 = vunpack.c.h.b16 %v142
    %v437 = vunpack.c.l.b16 %v143
    %v438 = vunpack.c.h.b16 %v143
    %v439 = vunpack.c.l.b16 %v144
    %v440 = vunpack.c.h.b16 %v144
    %v441 = vunpack.c.l.b16 %v145
    %v442 = vunpack.c.h.b16 %v145
    %v443 = vunpack.c.l.b16 %v146
    %v444 = vunpack.c.h.b16 %v146
    %v445 = vunpack.c.l.b16 %v147
    %v446 = vunpack.c.h.b16 %v147
    %v447 = vunpack.c.l.b16 %v148
    %v448 = vunpack.c.h.b16 %v148
    %v449 = vunpack.c.l.b16 %v149
    %v450 = vunpack.c.h.b16 %v149
    %v451 = vunpack.c.l.b16 %v150
    %v452 = vunpack.c.h.b16 %v150
    %v453 = vunpack.c.l.b16 %v151
    %v454 = vunpack.c.h.b16 %v151
    %v455 = vunpack.c.l.b16 %v152
    %v456 = vunpack.c.h.b16 %v152
    %v457 = vunpack.c.l.b16 %v153
    %v458 = vunpack.c.h.b16 %v153
    %v459 = vunpack.c.l.b16 %v154
    %v460 = vunpack.c.h.b16 %v154
    %v461 = vunpack.c.l.b16 %v155
    %v462 = vunpack.c.h.b16 %v155
    %v463 = vpack.c.b16 %v401, %v399
    %v464 = vpack.c.b16 %v402, %v400
    %v465 = vpack.c.b16 %v405, %v403
    %v466 = vpack.c.b16 %v406, %v404
    %v467 = vpack.c.b16 %v409, %v407
    %v468 = vpack.c.b16 %v410, %v408
    %v469 = vpack.c.b16 %v413, %v411
    %v470 = vpack.c.b16 %v414, %v412
    %v471 = vpack.c.b16 %v417, %v415
    %v472 = vpack.c.b16 %v418, %v416
    %v473 = vpack.c.b16 %v421, %v419
    %v474 = vpack.c.b16 %v422, %v420
    %v475 = vpack.c.b16 %v425, %v423
    %v476 = vpack.c.b16 %v426, %v424
    %v477 = vpack.c.b16 %v429, %v427
    %v478 = vpack.c.b16 %v430, %v428
    %v479 = vpack.c.b16 %v433, %v431
    %v480 = vpack.c.b16 %v434, %v432
    %v481 = vpack.c.b16 %v437, %v435
    %v482 = vpack.c.b16 %v438, %v436
    %v483 = vpack.c.b16 %v441, %v439
    %v484 = vpack.c.b16 %v442, %v440
    %v485 = vpack.c.b16 %v445, %v443
    %v486 = vpack.c.b16 %v446, %v444
    %v487 = vpack.c.b16 %v449, %v447
    %v488 = vpack.c.b16 %v450, %v448
    %v489 = vpack.c.b16 %v453, %v451
    %v490 = vpack.c.b16 %v454, %v452
    %v491 = vpack.c.b16 %v457, %v455
    %v492 = vpack.c.b16 %v458, %v456
    %v493 = vpack.c.b16 %v461, %v459
    %v494 = vpack.c.b16 %v462, %v460
    %527 = vmatprep.subr.bf16.mxu0 %v464
    %528 = vmatpush1.bf16.msra.mxu0 %v463
    %529 = vmatprep.subr.bf16.mxu0 %v466
    %530 = vmatpush1.bf16.msra.mxu0 %v465
    %531 = vmatprep.subr.bf16.mxu0 %v468
    %532 = vmatpush1.bf16.msra.mxu0 %v467
    %533 = vmatprep.subr.bf16.mxu0 %v470
    %534 = vmatpush1.bf16.msra.mxu0 %v469
    %535 = vmatprep.subr.bf16.mxu0 %v472
    %536 = vmatpush1.bf16.msra.mxu0 %v471
    %537 = vmatprep.subr.bf16.mxu0 %v474
    %538 = vmatpush1.bf16.msra.mxu0 %v473
    %539 = vmatprep.subr.bf16.mxu0 %v476
    %540 = vmatpush1.bf16.msra.mxu0 %v475
    %541 = vmatprep.subr.bf16.mxu0 %v478
    %542 = vmatpush1.bf16.msra.mxu0 %v477
    %543 = vmatprep.subr.bf16.mxu0 %v480
    %544 = vmatpush1.bf16.msra.mxu0 %v479
    %545 = vmatprep.subr.bf16.mxu0 %v482
    %546 = vmatpush1.bf16.msra.mxu0 %v481
    %547 = vmatprep.subr.bf16.mxu0 %v484
    %548 = vmatpush1.bf16.msra.mxu0 %v483
    %549 = vmatprep.subr.bf16.mxu0 %v486
    %550 = vmatpush1.bf16.msra.mxu0 %v485
    %551 = vmatprep.subr.bf16.mxu0 %v488
    %552 = vmatpush1.bf16.msra.mxu0 %v487
    %553 = vmatprep.subr.bf16.mxu0 %v490
    %554 = vmatpush1.bf16.msra.mxu0 %v489
    %555 = vmatprep.subr.bf16.mxu0 %v492
    %556 = vmatpush1.bf16.msra.mxu0 %v491
    %557 = vmatprep.subr.bf16.mxu0 %v494
    %558 = vmatpush1.bf16.msra.mxu0 %v493
    %559 = vmatprep.mubr.bf16.mxu0 %v163
    %560 = vmatmul.mubr.bf16.gmra.mrb[0].mxu0 %v162
    %v561 = vpop.f32.mrb[0].mxu0
    %v562 = vadd.f32 0.0, %v561
    %v563 = vpop.f32.mrb[0].mxu0
    %v564 = vadd.f32 0.0, %v563
    %v565 = vpop.f32.mrb[0].mxu0
    %v566 = vpop.f32.mrb[0].mxu0
    %567 = vdwg.mxu0
    %v569 = vunpack.c.l.b16 %v157
    %v570 = vunpack.c.h.b16 %v157
    %v571 = vpack.c.b16 %v569, %v569
    %v572 = vpack.c.b16 %v570, %v570
    %575 = vmatprep.subr.bf16.mxu0 %v263
    %576 = vmatpush1.bf16.msra.mxu0 %v262
    %577 = vmatprep.subr.bf16.mxu0 %v265
    %578 = vmatpush1.bf16.msra.mxu0 %v264
    %579 = vmatprep.subr.bf16.mxu0 %v267
    %580 = vmatpush1.bf16.msra.mxu0 %v266
    %581 = vmatprep.subr.bf16.mxu0 %v269
    %582 = vmatpush1.bf16.msra.mxu0 %v268
    %583 = vmatprep.subr.bf16.mxu0 %v271
    %584 = vmatpush1.bf16.msra.mxu0 %v270
    %585 = vmatprep.subr.bf16.mxu0 %v273
    %586 = vmatpush1.bf16.msra.mxu0 %v272
    %587 = vmatprep.subr.bf16.mxu0 %v275
    %588 = vmatpush1.bf16.msra.mxu0 %v274
    %589 = vmatprep.subr.bf16.mxu0 %v277
    %590 = vmatpush1.bf16.msra.mxu0 %v276
    %591 = vmatprep.subr.bf16.mxu0 %v279
    %592 = vmatpush1.bf16.msra.mxu0 %v278
    %593 = vmatprep.subr.bf16.mxu0 %v281
    %594 = vmatpush1.bf16.msra.mxu0 %v280
    %595 = vmatprep.subr.bf16.mxu0 %v283
    %596 = vmatpush1.bf16.msra.mxu0 %v282
    %597 = vmatprep.subr.bf16.mxu0 %v285
    %598 = vmatpush1.bf16.msra.mxu0 %v284
    %599 = vmatprep.subr.bf16.mxu0 %v287
    %600 = vmatpush1.bf16.msra.mxu0 %v286
    %601 = vmatprep.subr.bf16.mxu0 %v289
    %602 = vmatpush1.bf16.msra.mxu0 %v288
    %603 = vmatprep.subr.bf16.mxu0 %v291
    %604 = vmatpush1.bf16.msra.mxu0 %v290
    %605 = vmatprep.subr.bf16.mxu0 %v293
    %606 = vmatpush1.bf16.msra.mxu0 %v292
    %607 = vmatprep.mubr.bf16.mxu0 %v572
    %608 = vmatmul.mubr.bf16.gmra.mrb[0].mxu0 %v571
    %v609 = vpop.f32.mrb[0].mxu0
    %v610 = vadd.f32 0.0, %v609
    %v611 = vpop.f32.mrb[0].mxu0
    %v612 = vadd.f32 0.0, %v611
    %v613 = vpop.f32.mrb[0].mxu0
    %v614 = vpop.f32.mrb[0].mxu0
    %615 = vdwg.mxu0
    %616 = vmatprep.subr.bf16.mxu0 %v464
    %617 = vmatpush1.bf16.msra.mxu0 %v463
    %618 = vmatprep.subr.bf16.mxu0 %v466
    %619 = vmatpush1.bf16.msra.mxu0 %v465
    %620 = vmatprep.subr.bf16.mxu0 %v468
    %621 = vmatpush1.bf16.msra.mxu0 %v467
    %622 = vmatprep.subr.bf16.mxu0 %v470
    %623 = vmatpush1.bf16.msra.mxu0 %v469
    %624 = vmatprep.subr.bf16.mxu0 %v472
    %625 = vmatpush1.bf16.msra.mxu0 %v471
    %626 = vmatprep.subr.bf16.mxu0 %v474
    %627 = vmatpush1.bf16.msra.mxu0 %v473
    %628 = vmatprep.subr.bf16.mxu0 %v476
    %629 = vmatpush1.bf16.msra.mxu0 %v475
    %630 = vmatprep.subr.bf16.mxu0 %v478
    %631 = vmatpush1.bf16.msra.mxu0 %v477
    %632 = vmatprep.subr.bf16.mxu0 %v480
    %633 = vmatpush1.bf16.msra.mxu0 %v479
    %634 = vmatprep.subr.bf16.mxu0 %v482
    %635 = vmatpush1.bf16.msra.mxu0 %v481
    %636 = vmatprep.subr.bf16.mxu0 %v484
    %637 = vmatpush1.bf16.msra.mxu0 %v483
    %638 = vmatprep.subr.bf16.mxu0 %v486
    %639 = vmatpush1.bf16.msra.mxu0 %v485
    %640 = vmatprep.subr.bf16.mxu0 %v488
    %641 = vmatpush1.bf16.msra.mxu0 %v487
    %642 = vmatprep.subr.bf16.mxu0 %v490
    %643 = vmatpush1.bf16.msra.mxu0 %v489
    %644 = vmatprep.subr.bf16.mxu0 %v492
    %645 = vmatpush1.bf16.msra.mxu0 %v491
    %646 = vmatprep.subr.bf16.mxu0 %v494
    %647 = vmatpush1.bf16.msra.mxu0 %v493
    %648 = vmatprep.mubr.bf16.mxu0 %v572
    %649 = vmatmul.mubr.bf16.gmra.mrb[0].mxu0 %v571
    %v650 = vpop.f32.mrb[0].mxu0
    %v651 = vadd.f32 0.0, %v650
    %v652 = vpop.f32.mrb[0].mxu0
    %v653 = vadd.f32 0.0, %v652
    %v654 = vpop.f32.mrb[0].mxu0
    %v655 = vpop.f32.mrb[0].mxu0
    %656 = vdwg.mxu0
    %v658 = vunpack.c.l.b16 %v158
    %v659 = vunpack.c.h.b16 %v158
    %v660 = vpack.c.b16 %v658, %v658
    %v661 = vpack.c.b16 %v659, %v659
    %664 = vmatprep.subr.bf16.mxu0 %v263
    %665 = vmatpush1.bf16.msra.mxu0 %v262
    %666 = vmatprep.subr.bf16.mxu0 %v265
    %667 = vmatpush1.bf16.msra.mxu0 %v264
    %668 = vmatprep.subr.bf16.mxu0 %v267
    %669 = vmatpush1.bf16.msra.mxu0 %v266
    %670 = vmatprep.subr.bf16.mxu0 %v269
    %671 = vmatpush1.bf16.msra.mxu0 %v268
    %672 = vmatprep.subr.bf16.mxu0 %v271
    %673 = vmatpush1.bf16.msra.mxu0 %v270
    %674 = vmatprep.subr.bf16.mxu0 %v273
    %675 = vmatpush1.bf16.msra.mxu0 %v272
    %676 = vmatprep.subr.bf16.mxu0 %v275
    %677 = vmatpush1.bf16.msra.mxu0 %v274
    %678 = vmatprep.subr.bf16.mxu0 %v277
    %679 = vmatpush1.bf16.msra.mxu0 %v276
    %680 = vmatprep.subr.bf16.mxu0 %v279
    %681 = vmatpush1.bf16.msra.mxu0 %v278
    %682 = vmatprep.subr.bf16.mxu0 %v281
    %683 = vmatpush1.bf16.msra.mxu0 %v280
    %684 = vmatprep.subr.bf16.mxu0 %v283
    %685 = vmatpush1.bf16.msra.mxu0 %v282
    %686 = vmatprep.subr.bf16.mxu0 %v285
    %687 = vmatpush1.bf16.msra.mxu0 %v284
    %688 = vmatprep.subr.bf16.mxu0 %v287
    %689 = vmatpush1.bf16.msra.mxu0 %v286
    %690 = vmatprep.subr.bf16.mxu0 %v289
    %691 = vmatpush1.bf16.msra.mxu0 %v288
    %692 = vmatprep.subr.bf16.mxu0 %v291
    %693 = vmatpush1.bf16.msra.mxu0 %v290
    %694 = vmatprep.subr.bf16.mxu0 %v293
    %695 = vmatpush1.bf16.msra.mxu0 %v292
    %696 = vmatprep.mubr.bf16.mxu0 %v661
    %697 = vmatmul.mubr.bf16.gmra.mrb[0].mxu0 %v660
    %v698 = vpop.f32.mrb[0].mxu0
    %v699 = vadd.f32 0.0, %v698
    %v700 = vpop.f32.mrb[0].mxu0
    %v701 = vadd.f32 0.0, %v700
    %v702 = vpop.f32.mrb[0].mxu0
    %v703 = vpop.f32.mrb[0].mxu0
    %704 = vdwg.mxu0
    %705 = vmatprep.subr.bf16.mxu0 %v464
    %706 = vmatpush1.bf16.msra.mxu0 %v463
    %707 = vmatprep.subr.bf16.mxu0 %v466
    %708 = vmatpush1.bf16.msra.mxu0 %v465
    %709 = vmatprep.subr.bf16.mxu0 %v468
    %710 = vmatpush1.bf16.msra.mxu0 %v467
    %711 = vmatprep.subr.bf16.mxu0 %v470
    %712 = vmatpush1.bf16.msra.mxu0 %v469
    %713 = vmatprep.subr.bf16.mxu0 %v472
    %714 = vmatpush1.bf16.msra.mxu0 %v471
    %715 = vmatprep.subr.bf16.mxu0 %v474
    %716 = vmatpush1.bf16.msra.mxu0 %v473
    %717 = vmatprep.subr.bf16.mxu0 %v476
    %718 = vmatpush1.bf16.msra.mxu0 %v475
    %719 = vmatprep.subr.bf16.mxu0 %v478
    %720 = vmatpush1.bf16.msra.mxu0 %v477
    %721 = vmatprep.subr.bf16.mxu0 %v480
    %722 = vmatpush1.bf16.msra.mxu0 %v479
    %723 = vmatprep.subr.bf16.mxu0 %v482
    %724 = vmatpush1.bf16.msra.mxu0 %v481
    %725 = vmatprep.subr.bf16.mxu0 %v484
    %726 = vmatpush1.bf16.msra.mxu0 %v483
    %727 = vmatprep.subr.bf16.mxu0 %v486
    %728 = vmatpush1.bf16.msra.mxu0 %v485
    %729 = vmatprep.subr.bf16.mxu0 %v488
    %730 = vmatpush1.bf16.msra.mxu0 %v487
    %731 = vmatprep.subr.bf16.mxu0 %v490
    %732 = vmatpush1.bf16.msra.mxu0 %v489
    %733 = vmatprep.subr.bf16.mxu0 %v492
    %734 = vmatpush1.bf16.msra.mxu0 %v491
    %735 = vmatprep.subr.bf16.mxu0 %v494
    %736 = vmatpush1.bf16.msra.mxu0 %v493
    %737 = vmatprep.mubr.bf16.mxu0 %v661
    %738 = vmatmul.mubr.bf16.gmra.mrb[0].mxu0 %v660
    %v739 = vpop.f32.mrb[0].mxu0
    %v740 = vadd.f32 0.0, %v739
    %v741 = vpop.f32.mrb[0].mxu0
    %v742 = vadd.f32 0.0, %v741
    %v743 = vpop.f32.mrb[0].mxu0
    %v744 = vpop.f32.mrb[0].mxu0
    %745 = vdwg.mxu0
    %v746 = vld [vmem:[%s5] sm:$0x3]
    %v747 = vld [vmem:[%s6] sm:$0x3]
    %v748 = vld [vmem:[%s7] sm:$0x3]
    %v750 = vlaneseq
    %v751 = vshrl.u32 %v750, 7
    %v752 = vsub.s32 0, %v751
    %v753 = vrot.slane %v748, %v752
    %v754 = vlaneseq
    %v755 = vshrl.u32 %v754, 7
    %v756 = vsub.s32 1, %v755
    %v757 = vrot.slane %v748, %v756
    %v760 = vmul.f32 %v753, %v361
    %v761 = vmul.f32 %v757, %v363
    %v763 = vlaneseq
    %v764 = vshrl.u32 %v763, 7
    %v765 = vsub.s32 0, %v764
    %v766 = vrot.slane %v746, %v765
    %v767 = vlaneseq
    %v768 = vshrl.u32 %v767, 7
    %v769 = vsub.s32 1, %v768
    %v770 = vrot.slane %v746, %v769
    %v773 = vmul.f32 %v766, %v610
    %v774 = vmul.f32 %v770, %v612
    %v775 = vsub.f32 %v760, %v773
    %v776 = vsub.f32 %v761, %v774
    %v777 = vmul.f32 %v775, %v775
    %v778 = vmul.f32 %v776, %v776
    %v779 = vsub.f32 %v562, %v651
    %v780 = vsub.f32 %v564, %v653
    %v781 = vmul.f32 %v779, %v779
    %v782 = vmul.f32 %v780, %v780
    %v783 = vadd.f32 %v777, %v781
    %v784 = vadd.f32 %v778, %v782
    %v786 = vlaneseq
    %v787 = vshrl.u32 %v786, 7
    %v788 = vsub.s32 0, %v787
    %v789 = vrot.slane %v747, %v788
    %v790 = vlaneseq
    %v791 = vshrl.u32 %v790, 7
    %v792 = vsub.s32 1, %v791
    %v793 = vrot.slane %v747, %v792
    %v796 = vmul.f32 %v789, %v699
    %v797 = vmul.f32 %v793, %v701
    %v798 = vsub.f32 %v760, %v796
    %v799 = vsub.f32 %v761, %v797
    %v800 = vmul.f32 %v798, %v798
    %v801 = vmul.f32 %v799, %v799
    %v802 = vsub.f32 %v562, %v740
    %v803 = vsub.f32 %v564, %v742
    %v804 = vmul.f32 %v802, %v802
    %v805 = vmul.f32 %v803, %v803
    %v806 = vadd.f32 %v800, %v804
    %v807 = vadd.f32 %v801, %v805
    %v808 = vrsqrt.pop %v783
    %v809 = vmul.f32 %v783, %v808
    %vm810 = vcmp.eq.f32.partialorder %v783, inf
    %v811 = vsel %vm810, %v783, %v809
    %vm812 = vcmp.eq.f32.partialorder %v783, 0.0
    %v813 = vand.u32 %v783, 2147483648
    %v814 = vsel %vm812, %v813, %v811
    %v815 = vrsqrt.pop %v784
    %v816 = vmul.f32 %v784, %v815
    %vm817 = vcmp.eq.f32.partialorder %v784, inf
    %v818 = vsel %vm817, %v784, %v816
    %vm819 = vcmp.eq.f32.partialorder %v784, 0.0
    %v820 = vand.u32 %v784, 2147483648
    %v821 = vsel %vm819, %v820, %v818
    %v822 = vrsqrt.pop %v806
    %v823 = vmul.f32 %v806, %v822
    %vm824 = vcmp.eq.f32.partialorder %v806, inf
    %v825 = vsel %vm824, %v806, %v823
    %vm826 = vcmp.eq.f32.partialorder %v806, 0.0
    %v827 = vand.u32 %v806, 2147483648
    %v828 = vsel %vm826, %v827, %v825
    %v829 = vrsqrt.pop %v807
    %v830 = vmul.f32 %v807, %v829
    %vm831 = vcmp.eq.f32.partialorder %v807, inf
    %v832 = vsel %vm831, %v807, %v830
    %vm833 = vcmp.eq.f32.partialorder %v807, 0.0
    %v834 = vand.u32 %v807, 2147483648
    %v835 = vsel %vm833, %v834, %v832
    %v836 = vmax.f32 %v814, %v821
    %837 = vmax.xlane.f32.xlu0 %v836
    %v838 = vpop.xlane.xlu0 %837
    %v839 = vmax.f32 %v828, %v835
    %840 = vmax.xlane.f32.xlu0 %v839
    %v841 = vpop.xlane.xlu0 %840
    %v842 = vrcp.pop %v838
    %v843 = vmul.f32 %v814, %v842
    %v844 = vmul.f32 %v821, %v842
    %v845 = vrcp.pop %v841
    %v846 = vmul.f32 %v828, %v845
    %v847 = vmul.f32 %v835, %v845
    %vm848 = vcmp.ne.f32.partialorder %v843, %v843
    %vm849 = vcmp.ne.f32.partialorder %v844, %v844
    %v850 = vsel %vm848, 0.0, %v843
    %v851 = vsel %vm849, 0.0, %v844
    %v852 = vmax.f32 %v850, 0.0
    %v853 = vmax.f32 %v851, 0.0
    %v854 = vmin.f32 %v852, 1.0
    %v855 = vmin.f32 %v853, 1.0
    %vm856 = vcmp.ne.f32.partialorder %v846, %v846
    %vm857 = vcmp.ne.f32.partialorder %v847, %v847
    %v858 = vsel %vm856, 0.0, %v846
    %v859 = vsel %vm857, 0.0, %v847
    %v860 = vmax.f32 %v858, 0.0
    %v861 = vmax.f32 %v859, 0.0
    %v862 = vmin.f32 %v860, 1.0
    %v863 = vmin.f32 %v861, 1.0
    %v864 = vmul.f32 %v854, %v783
    %v865 = vmul.f32 %v855, %v784
    %v866 = vmul.f32 %v862, %v806
    %v867 = vmul.f32 %v863, %v807
    %v868 = vadd.f32 %v864, %v866
    %v869 = vadd.f32 %v865, %v867
    %v870 = vadd.f32 %v854, %v862
    %v871 = vadd.f32 %v855, %v863
    %v872 = vrcp.pop %v870
    %v873 = vrcp.pop %v871
    %v874 = vmul.f32 %v868, %v872
    %v875 = vmul.f32 %v869, %v873
    %s876 = smul.u32 0, 8
    %v877 = vlaneseq
    %v878 = vshrl.u32 %v877, 7
    %v879 = vstv %s876
    %v880 = vadd.s32 %v879, %v878
    %vm881 = vcmp.lt.s32.totalorder %v880, 2
    %v882 = vsel %vm881, 1, 0
    %vm883 = vcmp.eq.s32.totalorder %v882, 1
    %v884 = vsel %vm883, %v874, 0.0
    %v885 = vsel %vm883, %v875, 0.0
    %v886 = vadd.f32 %v884, 0.0
    %v887 = vadd.f32 %v885, 0.0
    %888 = vst [vmem:[#allocation11] sm:$0xff] %v886
    %889 = vst [vmem:[#allocation11 + $0x8] sm:$0xff] %v887
    // Predicated region
    $region54: #{tpu_custom_call.1} parent=1 // pred_check
      _
    $region55: #{tpu_custom_call.1} parent=1 // pred_check_branch
      %891 = sbr.rel (0) target = $region57
    $region56: #{tpu_custom_call.1} parent=1 // pred_region
      %s893 = ssub.s32 256, 256
      %894 = vsyncadd [#allocation4], %s893
      %s896 = sshll.u32 [#allocation11], 4
      %s897 = int_to_ptr.vmem [resolvable:$true] %s896
      %899 = dma.vmem_to_hbm [thread:$0]  %s897, 256, %s8, [#allocation4]
    $region57: #{tpu_custom_call.1} parent=1 // pred_fallthru
      _
    // Predicated region
    $region58: #{tpu_custom_call.1} parent=1 // pred_check
      _
    $region59: #{tpu_custom_call.1} parent=1 // pred_check_branch
      %901 = sbr.rel (0) target = $region61
    $region60: #{tpu_custom_call.1} parent=1 // pred_region
      %902 = dma.done [#allocation4], 256
    $region61: #{tpu_custom_call.1} parent=1 // pred_fallthru
      _
    %903 = vsyncpa [#allocation3], 1
    %904 = vsyncpa [#allocation6], 1
    %905 = vsyncpa [#allocation9], 1
    %906 = vsyncpa [#allocation4], 1

// kernel: tpu_custom_call.1
$region0: #{tpu_custom_call.1}
  #allocation0 [shape = 'u32[]', space=smem, size = 0x4, offset = 0x4, fixed_abs, tag = 'smem constant byte address 0x4 - core index']
  #allocation1 [shape = 'u32[144,128]{1,0:T(1,128)}', space=vmem, size = 0x12000, scoped, tag = 'internal scratch']
  %s0 = inlined_call_operand.hbm [shape: bf16[8,256], index: 0, kind: input, shape index: {}]
  %s1 = inlined_call_operand.hbm [shape: bf16[8,256], index: 1, kind: input, shape index: {}]
  %s2 = inlined_call_operand.hbm [shape: bf16[8,256], index: 2, kind: input, shape index: {}]
  %s3 = inlined_call_operand.hbm [shape: bf16[256,256], index: 3, kind: input, shape index: {}]
  %s4 = inlined_call_operand.hbm [shape: bf16[256,256], index: 4, kind: input, shape index: {}]
  %s5 = inlined_call_operand.vmem [shape: f32[1,256], index: 5, kind: input, shape index: {}]
  %s6 = inlined_call_operand.vmem [shape: f32[1,256], index: 6, kind: input, shape index: {}]
  %s7 = inlined_call_operand.vmem [shape: f32[1,256], index: 7, kind: input, shape index: {}]
  %s8 = inlined_call_operand.hbm [shape: f32[1,8,256], index: 8, kind: output, shape index: {}]
  %s9 = sld [smem:[#allocation0]]
  $region62: #{tpu_custom_call.1} parent=0
    _
  %s11 = ssub.s32 1, %s9
  %s12 = scalar_select 0, %s11, %s9
  $region1: #{tpu_custom_call.1} parent=0
    #allocation2 [shape = 'u8[4096]{0}', space=vmem, size = 0x1000, scoped, tag = 'input window, operand 0, single buffered']
    #allocation3 [shape = 's32[1]{0}', space=sflag, size = 0x4, scoped, tag = 'scoped memory for tpu_custom_call.1']
    #allocation4 [shape = 's32[1]{0}', space=sflag, size = 0x4, scoped, tag = 'scoped memory for tpu_custom_call.1']
    #allocation5 [shape = 'u8[4096]{0}', space=vmem, size = 0x1000, scoped, tag = 'input window, operand 1, single buffered']
    #allocation6 [shape = 's32[1]{0}', space=sflag, size = 0x4, scoped, tag = 'scoped memory for tpu_custom_call.1']
    #allocation7 [shape = 'u8[4096]{0}', space=vmem, size = 0x1000, scoped, tag = 'input window, operand 2, single buffered']
    #allocation8 [shape = 'u8[131072]{0}', space=vmem, size = 0x20000, scoped, tag = 'input window, operand 3, single buffered']
    #allocation9 [shape = 's32[1]{0}', space=sflag, size = 0x4, scoped, tag = 'scoped memory for tpu_custom_call.1']
    #allocation10 [shape = 'u8[131072]{0}', space=vmem, size = 0x20000, scoped, tag = 'input window, operand 4, single buffered']
    #allocation11 [shape = 'u8[8192]{0}', space=vmem, size = 0x2000, scoped, tag = 'output window, operand 0, single buffered']
    %13 = vsyncpa [#allocation3], 0
    %14 = vsyncpa [#allocation6], 0
    %15 = vsyncpa [#allocation9], 0
    %16 = vsyncpa [#allocation4], 0
    // Predicated region
    $region2: #{tpu_custom_call.1} parent=1 // pred_check
      _
    $region3: #{tpu_custom_call.1} parent=1 // pred_check_branch
      %18 = sbr.rel (0) target = $region5
    $region4: #{tpu_custom_call.1} parent=1 // pred_region
      %s20 = ssub.s32 128, 128
      %21 = vsyncadd [#allocation3], %s20
      %s23 = sshll.u32 [#allocation2], 4
      %s24 = int_to_ptr.vmem [resolvable:$true] %s23
      %26 = dma.hbm_to_vmem [thread:$0]  %s0, 128, %s24, [#allocation3]
    $region5: #{tpu_custom_call.1} parent=1 // pred_fallthru
      _
    // Predicated region
    $region6: #{tpu_custom_call.1} parent=1 // pred_check
      _
    $region7: #{tpu_custom_call.1} parent=1 // pred_check_branch
      %28 = sbr.rel (0) target = $region9
    $region8: #{tpu_custom_call.1} parent=1 // pred_region
      %s30 = ssub.s32 128, 128
      %31 = vsyncadd [#allocation6], %s30
      %s33 = sshll.u32 [#allocation5], 4
      %s34 = int_to_ptr.vmem [resolvable:$true] %s33
      %36 = dma.hbm_to_vmem [thread:$0]  %s1, 128, %s34, [#allocation6]
    $region9: #{tpu_custom_call.1} parent=1 // pred_fallthru
      _
    // Predicated region
    $region10: #{tpu_custom_call.1} parent=1 // pred_check
      _
    $region11: #{tpu_custom_call.1} parent=1 // pred_check_branch
      %38 = sbr.rel (0) target = $region13
    $region12: #{tpu_custom_call.1} parent=1 // pred_region
      %s40 = ssub.s32 128, 128
      %41 = vsyncadd [#allocation6], %s40
      %s43 = sshll.u32 [#allocation7], 4
      %s44 = int_to_ptr.vmem [resolvable:$true] %s43
      %46 = dma.hbm_to_vmem [thread:$0]  %s2, 128, %s44, [#allocation6]
    $region13: #{tpu_custom_call.1} parent=1 // pred_fallthru
      _
    // Predicated region
    $region14: #{tpu_custom_call.1} parent=1 // pred_check
      _
    $region15: #{tpu_custom_call.1} parent=1 // pred_check_branch
      %48 = sbr.rel (0) target = $region17
    $region16: #{tpu_custom_call.1} parent=1 // pred_region
      %s50 = ssub.s32 4096, 4096
      %51 = vsyncadd [#allocation9], %s50
      %s52 = sshll.u32 [#allocation8], 4
      %s53 = int_to_ptr.vmem [resolvable:$true] %s52
      %58 = dma.hbm_to_vmem [thread:$0]  %s3, 4096, %s53, [#allocation9], 128, 128, 8
    $region17: #{tpu_custom_call.1} parent=1 // pred_fallthru
      _
    // Predicated region
    $region18: #{tpu_custom_call.1} parent=1 // pred_check
      _
    $region19: #{tpu_custom_call.1} parent=1 // pred_check_branch
      %60 = sbr.rel (0) target = $region21
    $region20: #{tpu_custom_call.1} parent=1 // pred_region
      %s62 = ssub.s32 4096, 4096
      %63 = vsyncadd [#allocation9], %s62
      %s64 = sshll.u32 [#allocation10], 4
      %s65 = int_to_ptr.vmem [resolvable:$true] %s64
      %70 = dma.hbm_to_vmem [thread:$0]  %s4, 4096, %s65, [#allocation9], 128, 128, 8
    $region21: #{tpu_custom_call.1} parent=1 // pred_fallthru
      _
    // Predicated region
    $region22: #{tpu_custom_call.1} parent=1 // pred_check
      _
    $region23: #{tpu_custom_call.1} parent=1 // pred_check_branch
      %72 = sbr.rel (0) target = $region25
    $region24: #{tpu_custom_call.1} parent=1 // pred_region
      _
    $region25: #{tpu_custom_call.1} parent=1 // pred_fallthru
      _
    // Predicated region
    $region26: #{tpu_custom_call.1} parent=1 // pred_check
      _
    $region27: #{tpu_custom_call.1} parent=1 // pred_check_branch
      %74 = sbr.rel (0) target = $region29
    $region28: #{tpu_custom_call.1} parent=1 // pred_region
      _
    $region29: #{tpu_custom_call.1} parent=1 // pred_fallthru
      _
    // Predicated region
    $region30: #{tpu_custom_call.1} parent=1 // pred_check
      _
    $region31: #{tpu_custom_call.1} parent=1 // pred_check_branch
      %76 = sbr.rel (0) target = $region33
    $region32: #{tpu_custom_call.1} parent=1 // pred_region
      _
    $region33: #{tpu_custom_call.1} parent=1 // pred_fallthru
      _
    // Predicated region
    $region34: #{tpu_custom_call.1} parent=1 // pred_check
      _
    $region35: #{tpu_custom_call.1} parent=1 // pred_check_branch
      %78 = sbr.rel (0) target = $region37
    $region36: #{tpu_custom_call.1} parent=1 // pred_region
      %79 = dma.done [#allocation3], 128
    $region37: #{tpu_custom_call.1} parent=1 // pred_fallthru
      _
    // Predicated region
    $region38: #{tpu_custom_call.1} parent=1 // pred_check
      _
    $region39: #{tpu_custom_call.1} parent=1 // pred_check_branch
      %81 = sbr.rel (0) target = $region41
    $region40: #{tpu_custom_call.1} parent=1 // pred_region
      %82 = dma.done [#allocation6], 128
    $region41: #{tpu_custom_call.1} parent=1 // pred_fallthru
      _
    // Predicated region
    $region42: #{tpu_custom_call.1} parent=1 // pred_check
      _
    $region43: #{tpu_custom_call.1} parent=1 // pred_check_branch
      %84 = sbr.rel (0) target = $region45
    $region44: #{tpu_custom_call.1} parent=1 // pred_region
      %85 = dma.done [#allocation6], 128
    $region45: #{tpu_custom_call.1} parent=1 // pred_fallthru
      _
    // Predicated region
    $region46: #{tpu_custom_call.1} parent=1 // pred_check
      _
    $region47: #{tpu_custom_call.1} parent=1 // pred_check_branch
      %87 = sbr.rel (0) target = $region49
    $region48: #{tpu_custom_call.1} parent=1 // pred_region
      %88 = dma.done [#allocation9], 4096
    $region49: #{tpu_custom_call.1} parent=1 // pred_fallthru
      _
    // Predicated region
    $region50: #{tpu_custom_call.1} parent=1 // pred_check
      _
    $region51: #{tpu_custom_call.1} parent=1 // pred_check_branch
      %90 = sbr.rel (0) target = $region53
    $region52: #{tpu_custom_call.1} parent=1 // pred_region
      %91 = dma.done [#allocation9], 4096
    $region53: #{tpu_custom_call.1} parent=1 // pred_fallthru
      _
    %v92 = vld [vmem:[#allocation8] sm:$0xff]
    %v93 = vld [vmem:[#allocation8 + $0x8] sm:$0xff]
    %v94 = vld [vmem:[#allocation8 + $0x10] sm:$0xff]
    %v95 = vld [vmem:[#allocation8 + $0x18] sm:$0xff]
    %v96 = vld [vmem:[#allocation8 + $0x20] sm:$0xff]
    %v97 = vld [vmem:[#allocation8 + $0x28] sm:$0xff]
    %v98 = vld [vmem:[#allocation8 + $0x30] sm:$0xff]
    %v99 = vld [vmem:[#allocation8 + $0x38] sm:$0xff]
    %v100 = vld [vmem:[#allocation8 + $0x40] sm:$0xff]
    %v101 = vld [vmem:[#allocation8 + $0x48] sm:$0xff]
    %v102 = vld [vmem:[#allocation8 + $0x50] sm:$0xff]
    %v103 = vld [vmem:[#allocation8 + $0x58] sm:$0xff]
    %v104 = vld [vmem:[#allocation8 + $0x60] sm:$0xff]
    %v105 = vld [vmem:[#allocation8 + $0x68] sm:$0xff]
    %v106 = vld [vmem:[#allocation8 + $0x70] sm:$0xff]
    %v107 = vld [vmem:[#allocation8 + $0x78] sm:$0xff]
    %v108 = vld [vmem:[#allocation8 + $0x80] sm:$0xff]
    %v109 = vld [vmem:[#allocation8 + $0x88] sm:$0xff]
    %v110 = vld [vmem:[#allocation8 + $0x90] sm:$0xff]
    %v111 = vld [vmem:[#allocation8 + $0x98] sm:$0xff]
    %v112 = vld [vmem:[#allocation8 + $0xa0] sm:$0xff]
    %v113 = vld [vmem:[#allocation8 + $0xa8] sm:$0xff]
    %v114 = vld [vmem:[#allocation8 + $0xb0] sm:$0xff]
    %v115 = vld [vmem:[#allocation8 + $0xb8] sm:$0xff]
    %v116 = vld [vmem:[#allocation8 + $0xc0] sm:$0xff]
    %v117 = vld [vmem:[#allocation8 + $0xc8] sm:$0xff]
    %v118 = vld [vmem:[#allocation8 + $0xd0] sm:$0xff]
    %v119 = vld [vmem:[#allocation8 + $0xd8] sm:$0xff]
    %v120 = vld [vmem:[#allocation8 + $0xe0] sm:$0xff]
    %v121 = vld [vmem:[#allocation8 + $0xe8] sm:$0xff]
    %v122 = vld [vmem:[#allocation8 + $0xf0] sm:$0xff]
    %v123 = vld [vmem:[#allocation8 + $0xf8] sm:$0xff]
    %v124 = vld [vmem:[#allocation10] sm:$0xff]
    %v125 = vld [vmem:[#allocation10 + $0x8] sm:$0xff]
    %v126 = vld [vmem:[#allocation10 + $0x10] sm:$0xff]
    %v127 = vld [vmem:[#allocation10 + $0x18] sm:$0xff]
    %v128 = vld [vmem:[#allocation10 + $0x20] sm:$0xff]
    %v129 = vld [vmem:[#allocation10 + $0x28] sm:$0xff]
    %v130 = vld [vmem:[#allocation10 + $0x30] sm:$0xff]
    %v131 = vld [vmem:[#allocation10 + $0x38] sm:$0xff]
    %v132 = vld [vmem:[#allocation10 + $0x40] sm:$0xff]
    %v133 = vld [vmem:[#allocation10 + $0x48] sm:$0xff]
    %v134 = vld [vmem:[#allocation10 + $0x50] sm:$0xff]
    %v135 = vld [vmem:[#allocation10 + $0x58] sm:$0xff]
    %v136 = vld [vmem:[#allocation10 + $0x60] sm:$0xff]
    %v137 = vld [vmem:[#allocation10 + $0x68] sm:$0xff]
    %v138 = vld [vmem:[#allocation10 + $0x70] sm:$0xff]
    %v139 = vld [vmem:[#allocation10 + $0x78] sm:$0xff]
    %v140 = vld [vmem:[#allocation10 + $0x80] sm:$0xff]
    %v141 = vld [vmem:[#allocation10 + $0x88] sm:$0xff]
    %v142 = vld [vmem:[#allocation10 + $0x90] sm:$0xff]
    %v143 = vld [vmem:[#allocation10 + $0x98] sm:$0xff]
    %v144 = vld [vmem:[#allocation10 + $0xa0] sm:$0xff]
    %v145 = vld [vmem:[#allocation10 + $0xa8] sm:$0xff]
    %v146 = vld [vmem:[#allocation10 + $0xb0] sm:$0xff]
    %v147 = vld [vmem:[#allocation10 + $0xb8] sm:$0xff]
    %v148 = vld [vmem:[#allocation10 + $0xc0] sm:$0xff]
    %v149 = vld [vmem:[#allocation10 + $0xc8] sm:$0xff]
    %v150 = vld [vmem:[#allocation10 + $0xd0] sm:$0xff]
    %v151 = vld [vmem:[#allocation10 + $0xd8] sm:$0xff]
    %v152 = vld [vmem:[#allocation10 + $0xe0] sm:$0xff]
    %v153 = vld [vmem:[#allocation10 + $0xe8] sm:$0xff]
    %v154 = vld [vmem:[#allocation10 + $0xf0] sm:$0xff]
    %v155 = vld [vmem:[#allocation10 + $0xf8] sm:$0xff]
    %v156 = vld [vmem:[#allocation2] sm:$0xff]
    %v157 = vld [vmem:[#allocation5] sm:$0xff]
    %v158 = vld [vmem:[#allocation7] sm:$0xff]
    %v160 = vunpack.c.l.b16 %v156
    %v161 = vunpack.c.h.b16 %v156
    %v162 = vpack.c.b16 %v160, %v160
    %v163 = vpack.c.b16 %v161, %v161
    %v198 = vunpack.c.l.b16 %v92
    %v199 = vunpack.c.h.b16 %v92
    %v200 = vunpack.c.l.b16 %v93
    %v201 = vunpack.c.h.b16 %v93
    %v202 = vunpack.c.l.b16 %v94
    %v203 = vunpack.c.h.b16 %v94
    %v204 = vunpack.c.l.b16 %v95
    %v205 = vunpack.c.h.b16 %v95
    %v206 = vunpack.c.l.b16 %v96
    %v207 = vunpack.c.h.b16 %v96
    %v208 = vunpack.c.l.b16 %v97
    %v209 = vunpack.c.h.b16 %v97
    %v210 = vunpack.c.l.b16 %v98
    %v211 = vunpack.c.h.b16 %v98
    %v212 = vunpack.c.l.b16 %v99
    %v213 = vunpack.c.h.b16 %v99
    %v214 = vunpack.c.l.b16 %v100
    %v215 = vunpack.c.h.b16 %v100
    %v216 = vunpack.c.l.b16 %v101
    %v217 = vunpack.c.h.b16 %v101
    %v218 = vunpack.c.l.b16 %v102
    %v219 = vunpack.c.h.b16 %v102
    %v220 = vunpack.c.l.b16 %v103
    %v221 = vunpack.c.h.b16 %v103
    %v222 = vunpack.c.l.b16 %v104
    %v223 = vunpack.c.h.b16 %v104
    %v224 = vunpack.c.l.b16 %v105
    %v225 = vunpack.c.h.b16 %v105
    %v226 = vunpack.c.l.b16 %v106
    %v227 = vunpack.c.h.b16 %v106
    %v228 = vunpack.c.l.b16 %v107
    %v229 = vunpack.c.h.b16 %v107
    %v230 = vunpack.c.l.b16 %v108
    %v231 = vunpack.c.h.b16 %v108
    %v232 = vunpack.c.l.b16 %v109
    %v233 = vunpack.c.h.b16 %v109
    %v234 = vunpack.c.l.b16 %v110
    %v235 = vunpack.c.h.b16 %v110
    %v236 = vunpack.c.l.b16 %v111
    %v237 = vunpack.c.h.b16 %v111
    %v238 = vunpack.c.l.b16 %v112
    %v239 = vunpack.c.h.b16 %v112
    %v240 = vunpack.c.l.b16 %v113
    %v241 = vunpack.c.h.b16 %v113
    %v242 = vunpack.c.l.b16 %v114
    %v243 = vunpack.c.h.b16 %v114
    %v244 = vunpack.c.l.b16 %v115
    %v245 = vunpack.c.h.b16 %v115
    %v246 = vunpack.c.l.b16 %v116
    %v247 = vunpack.c.h.b16 %v116
    %v248 = vunpack.c.l.b16 %v117
    %v249 = vunpack.c.h.b16 %v117
    %v250 = vunpack.c.l.b16 %v118
    %v251 = vunpack.c.h.b16 %v118
    %v252 = vunpack.c.l.b16 %v119
    %v253 = vunpack.c.h.b16 %v119
    %v254 = vunpack.c.l.b16 %v120
    %v255 = vunpack.c.h.b16 %v120
    %v256 = vunpack.c.l.b16 %v121
    %v257 = vunpack.c.h.b16 %v121
    %v258 = vunpack.c.l.b16 %v122
    %v259 = vunpack.c.h.b16 %v122
    %v260 = vunpack.c.l.b16 %v123
    %v261 = vunpack.c.h.b16 %v123
    %v262 = vpack.c.b16 %v200, %v198
    %v263 = vpack.c.b16 %v201, %v199
    %v264 = vpack.c.b16 %v204, %v202
    %v265 = vpack.c.b16 %v205, %v203
    %v266 = vpack.c.b16 %v208, %v206
    %v267 = vpack.c.b16 %v209, %v207
    %v268 = vpack.c.b16 %v212, %v210
    %v269 = vpack.c.b16 %v213, %v211
    %v270 = vpack.c.b16 %v216, %v214
    %v271 = vpack.c.b16 %v217, %v215
    %v272 = vpack.c.b16 %v220, %v218
    %v273 = vpack.c.b16 %v221, %v219
    %v274 = vpack.c.b16 %v224, %v222
    %v275 = vpack.c.b16 %v225, %v223
    %v276 = vpack.c.b16 %v228, %v226
    %v277 = vpack.c.b16 %v229, %v227
    %v278 = vpack.c.b16 %v232, %v230
    %v279 = vpack.c.b16 %v233, %v231
    %v280 = vpack.c.b16 %v236, %v234
    %v281 = vpack.c.b16 %v237, %v235
    %v282 = vpack.c.b16 %v240, %v238
    %v283 = vpack.c.b16 %v241, %v239
    %v284 = vpack.c.b16 %v244, %v242
    %v285 = vpack.c.b16 %v245, %v243
    %v286 = vpack.c.b16 %v248, %v246
    %v287 = vpack.c.b16 %v249, %v247
    %v288 = vpack.c.b16 %v252, %v250
    %v289 = vpack.c.b16 %v253, %v251
    %v290 = vpack.c.b16 %v256, %v254
    %v291 = vpack.c.b16 %v257, %v255
    %v292 = vpack.c.b16 %v260, %v258
    %v293 = vpack.c.b16 %v261, %v259
    %326 = vmatprep.subr.bf16.mxu0 %v263
    %327 = vmatpush1.bf16.msra.mxu0 %v262
    %328 = vmatprep.subr.bf16.mxu0 %v265
    %329 = vmatpush1.bf16.msra.mxu0 %v264
    %330 = vmatprep.subr.bf16.mxu0 %v267
    %331 = vmatpush1.bf16.msra.mxu0 %v266
    %332 = vmatprep.subr.bf16.mxu0 %v269
    %333 = vmatpush1.bf16.msra.mxu0 %v268
    %334 = vmatprep.subr.bf16.mxu0 %v271
    %335 = vmatpush1.bf16.msra.mxu0 %v270
    %336 = vmatprep.subr.bf16.mxu0 %v273
    %337 = vmatpush1.bf16.msra.mxu0 %v272
    %338 = vmatprep.subr.bf16.mxu0 %v275
    %339 = vmatpush1.bf16.msra.mxu0 %v274
    %340 = vmatprep.subr.bf16.mxu0 %v277
    %341 = vmatpush1.bf16.msra.mxu0 %v276
    %342 = vmatprep.subr.bf16.mxu0 %v279
    %343 = vmatpush1.bf16.msra.mxu0 %v278
    %344 = vmatprep.subr.bf16.mxu0 %v281
    %345 = vmatpush1.bf16.msra.mxu0 %v280
    %346 = vmatprep.subr.bf16.mxu0 %v283
    %347 = vmatpush1.bf16.msra.mxu0 %v282
    %348 = vmatprep.subr.bf16.mxu0 %v285
    %349 = vmatpush1.bf16.msra.mxu0 %v284
    %350 = vmatprep.subr.bf16.mxu0 %v287
    %351 = vmatpush1.bf16.msra.mxu0 %v286
    %352 = vmatprep.subr.bf16.mxu0 %v289
    %353 = vmatpush1.bf16.msra.mxu0 %v288
    %354 = vmatprep.subr.bf16.mxu0 %v291
    %355 = vmatpush1.bf16.msra.mxu0 %v290
    %356 = vmatprep.subr.bf16.mxu0 %v293
    %357 = vmatpush1.bf16.msra.mxu0 %v292
    %358 = vmatprep.mubr.bf16.mxu0 %v163
    %359 = vmatmul.mubr.bf16.gmra.mrb[0].mxu0 %v162
    %v360 = vpop.f32.mrb[0].mxu0
    %v361 = vadd.f32 0.0, %v360
    %v362 = vpop.f32.mrb[0].mxu0
    %v363 = vadd.f32 0.0, %v362
    %v364 = vpop.f32.mrb[0].mxu0
    %v365 = vpop.f32.mrb[0].mxu0
    %366 = vdwg.mxu0
    %v399 = vunpack.c.l.b16 %v124
    %v400 = vunpack.c.h.b16 %v124
    %v401 = vunpack.c.l.b16 %v125
    %v402 = vunpack.c.h.b16 %v125
    %v403 = vunpack.c.l.b16 %v126
    %v404 = vunpack.c.h.b16 %v126
    %v405 = vunpack.c.l.b16 %v127
    %v406 = vunpack.c.h.b16 %v127
    %v407 = vunpack.c.l.b16 %v128
    %v408 = vunpack.c.h.b16 %v128
    %v409 = vunpack.c.l.b16 %v129
    %v410 = vunpack.c.h.b16 %v129
    %v411 = vunpack.c.l.b16 %v130
    %v412 = vunpack.c.h.b16 %v130
    %v413 = vunpack.c.l.b16 %v131
    %v414 = vunpack.c.h.b16 %v131
    %v415 = vunpack.c.l.b16 %v132
    %v416 = vunpack.c.h.b16 %v132
    %v417 = vunpack.c.l.b16 %v133
    %v418 = vunpack.c.h.b16 %v133
    %v419 = vunpack.c.l.b16 %v134
    %v420 = vunpack.c.h.b16 %v134
    %v421 = vunpack.c.l.b16 %v135
    %v422 = vunpack.c.h.b16 %v135
    %v423 = vunpack.c.l.b16 %v136
    %v424 = vunpack.c.h.b16 %v136
    %v425 = vunpack.c.l.b16 %v137
    %v426 = vunpack.c.h.b16 %v137
    %v427 = vunpack.c.l.b16 %v138
    %v428 = vunpack.c.h.b16 %v138
    %v429 = vunpack.c.l.b16 %v139
    %v430 = vunpack.c.h.b16 %v139
    %v431 = vunpack.c.l.b16 %v140
    %v432 = vunpack.c.h.b16 %v140
    %v433 = vunpack.c.l.b16 %v141
    %v434 = vunpack.c.h.b16 %v141
    %v435 = vunpack.c.l.b16 %v142
    %v436 = vunpack.c.h.b16 %v142
    %v437 = vunpack.c.l.b16 %v143
    %v438 = vunpack.c.h.b16 %v143
    %v439 = vunpack.c.l.b16 %v144
    %v440 = vunpack.c.h.b16 %v144
    %v441 = vunpack.c.l.b16 %v145
    %v442 = vunpack.c.h.b16 %v145
    %v443 = vunpack.c.l.b16 %v146
    %v444 = vunpack.c.h.b16 %v146
    %v445 = vunpack.c.l.b16 %v147
    %v446 = vunpack.c.h.b16 %v147
    %v447 = vunpack.c.l.b16 %v148
    %v448 = vunpack.c.h.b16 %v148
    %v449 = vunpack.c.l.b16 %v149
    %v450 = vunpack.c.h.b16 %v149
    %v451 = vunpack.c.l.b16 %v150
    %v452 = vunpack.c.h.b16 %v150
    %v453 = vunpack.c.l.b16 %v151
    %v454 = vunpack.c.h.b16 %v151
    %v455 = vunpack.c.l.b16 %v152
    %v456 = vunpack.c.h.b16 %v152
    %v457 = vunpack.c.l.b16 %v153
    %v458 = vunpack.c.h.b16 %v153
    %v459 = vunpack.c.l.b16 %v154
    %v460 = vunpack.c.h.b16 %v154
    %v461 = vunpack.c.l.b16 %v155
    %v462 = vunpack.c.h.b16 %v155
    %v463 = vpack.c.b16 %v401, %v399
    %v464 = vpack.c.b16 %v402, %v400
    %v465 = vpack.c.b16 %v405, %v403
    %v466 = vpack.c.b16 %v406, %v404
    %v467 = vpack.c.b16 %v409, %v407
    %v468 = vpack.c.b16 %v410, %v408
    %v469 = vpack.c.b16 %v413, %v411
    %v470 = vpack.c.b16 %v414, %v412
    %v471 = vpack.c.b16 %v417, %v415
    %v472 = vpack.c.b16 %v418, %v416
    %v473 = vpack.c.b16 %v421, %v419
    %v474 = vpack.c.b16 %v422, %v420
    %v475 = vpack.c.b16 %v425, %v423
    %v476 = vpack.c.b16 %v426, %v424
    %v477 = vpack.c.b16 %v429, %v427
    %v478 = vpack.c.b16 %v430, %v428
    %v479 = vpack.c.b16 %v433, %v431
    %v480 = vpack.c.b16 %v434, %v432
    %v481 = vpack.c.b16 %v437, %v435
    %v482 = vpack.c.b16 %v438, %v436
    %v483 = vpack.c.b16 %v441, %v439
    %v484 = vpack.c.b16 %v442, %v440
    %v485 = vpack.c.b16 %v445, %v443
    %v486 = vpack.c.b16 %v446, %v444
    %v487 = vpack.c.b16 %v449, %v447
    %v488 = vpack.c.b16 %v450, %v448
    %v489 = vpack.c.b16 %v453, %v451
    %v490 = vpack.c.b16 %v454, %v452
    %v491 = vpack.c.b16 %v457, %v455
    %v492 = vpack.c.b16 %v458, %v456
    %v493 = vpack.c.b16 %v461, %v459
    %v494 = vpack.c.b16 %v462, %v460
    %527 = vmatprep.subr.bf16.mxu0 %v464
    %528 = vmatpush1.bf16.msra.mxu0 %v463
    %529 = vmatprep.subr.bf16.mxu0 %v466
    %530 = vmatpush1.bf16.msra.mxu0 %v465
    %531 = vmatprep.subr.bf16.mxu0 %v468
    %532 = vmatpush1.bf16.msra.mxu0 %v467
    %533 = vmatprep.subr.bf16.mxu0 %v470
    %534 = vmatpush1.bf16.msra.mxu0 %v469
    %535 = vmatprep.subr.bf16.mxu0 %v472
    %536 = vmatpush1.bf16.msra.mxu0 %v471
    %537 = vmatprep.subr.bf16.mxu0 %v474
    %538 = vmatpush1.bf16.msra.mxu0 %v473
    %539 = vmatprep.subr.bf16.mxu0 %v476
    %540 = vmatpush1.bf16.msra.mxu0 %v475
    %541 = vmatprep.subr.bf16.mxu0 %v478
    %542 = vmatpush1.bf16.msra.mxu0 %v477
    %543 = vmatprep.subr.bf16.mxu0 %v480
    %544 = vmatpush1.bf16.msra.mxu0 %v479
    %545 = vmatprep.subr.bf16.mxu0 %v482
    %546 = vmatpush1.bf16.msra.mxu0 %v481
    %547 = vmatprep.subr.bf16.mxu0 %v484
    %548 = vmatpush1.bf16.msra.mxu0 %v483
    %549 = vmatprep.subr.bf16.mxu0 %v486
    %550 = vmatpush1.bf16.msra.mxu0 %v485
    %551 = vmatprep.subr.bf16.mxu0 %v488
    %552 = vmatpush1.bf16.msra.mxu0 %v487
    %553 = vmatprep.subr.bf16.mxu0 %v490
    %554 = vmatpush1.bf16.msra.mxu0 %v489
    %555 = vmatprep.subr.bf16.mxu0 %v492
    %556 = vmatpush1.bf16.msra.mxu0 %v491
    %557 = vmatprep.subr.bf16.mxu0 %v494
    %558 = vmatpush1.bf16.msra.mxu0 %v493
    %559 = vmatprep.mubr.bf16.mxu0 %v163
    %560 = vmatmul.mubr.bf16.gmra.mrb[0].mxu0 %v162
    %v561 = vpop.f32.mrb[0].mxu0
    %v562 = vadd.f32 0.0, %v561
    %v563 = vpop.f32.mrb[0].mxu0
    %v564 = vadd.f32 0.0, %v563
    %v565 = vpop.f32.mrb[0].mxu0
    %v566 = vpop.f32.mrb[0].mxu0
    %567 = vdwg.mxu0
    %v569 = vunpack.c.l.b16 %v157
    %v570 = vunpack.c.h.b16 %v157
    %v571 = vpack.c.b16 %v569, %v569
    %v572 = vpack.c.b16 %v570, %v570
    %575 = vmatprep.subr.bf16.mxu0 %v263
    %576 = vmatpush1.bf16.msra.mxu0 %v262
    %577 = vmatprep.subr.bf16.mxu0 %v265
    %578 = vmatpush1.bf16.msra.mxu0 %v264
    %579 = vmatprep.subr.bf16.mxu0 %v267
    %580 = vmatpush1.bf16.msra.mxu0 %v266
    %581 = vmatprep.subr.bf16.mxu0 %v269
    %582 = vmatpush1.bf16.msra.mxu0 %v268
    %583 = vmatprep.subr.bf16.mxu0 %v271
    %584 = vmatpush1.bf16.msra.mxu0 %v270
    %585 = vmatprep.subr.bf16.mxu0 %v273
    %586 = vmatpush1.bf16.msra.mxu0 %v272
    %587 = vmatprep.subr.bf16.mxu0 %v275
    %588 = vmatpush1.bf16.msra.mxu0 %v274
    %589 = vmatprep.subr.bf16.mxu0 %v277
    %590 = vmatpush1.bf16.msra.mxu0 %v276
    %591 = vmatprep.subr.bf16.mxu0 %v279
    %592 = vmatpush1.bf16.msra.mxu0 %v278
    %593 = vmatprep.subr.bf16.mxu0 %v281
    %594 = vmatpush1.bf16.msra.mxu0 %v280
    %595 = vmatprep.subr.bf16.mxu0 %v283
    %596 = vmatpush1.bf16.msra.mxu0 %v282
    %597 = vmatprep.subr.bf16.mxu0 %v285
    %598 = vmatpush1.bf16.msra.mxu0 %v284
    %599 = vmatprep.subr.bf16.mxu0 %v287
    %600 = vmatpush1.bf16.msra.mxu0 %v286
    %601 = vmatprep.subr.bf16.mxu0 %v289
    %602 = vmatpush1.bf16.msra.mxu0 %v288
    %603 = vmatprep.subr.bf16.mxu0 %v291
    %604 = vmatpush1.bf16.msra.mxu0 %v290
    %605 = vmatprep.subr.bf16.mxu0 %v293
    %606 = vmatpush1.bf16.msra.mxu0 %v292
    %607 = vmatprep.mubr.bf16.mxu0 %v572
    %608 = vmatmul.mubr.bf16.gmra.mrb[0].mxu0 %v571
    %v609 = vpop.f32.mrb[0].mxu0
    %v610 = vadd.f32 0.0, %v609
    %v611 = vpop.f32.mrb[0].mxu0
    %v612 = vadd.f32 0.0, %v611
    %v613 = vpop.f32.mrb[0].mxu0
    %v614 = vpop.f32.mrb[0].mxu0
    %615 = vdwg.mxu0
    %616 = vmatprep.subr.bf16.mxu0 %v464
    %617 = vmatpush1.bf16.msra.mxu0 %v463
    %618 = vmatprep.subr.bf16.mxu0 %v466
    %619 = vmatpush1.bf16.msra.mxu0 %v465
    %620 = vmatprep.subr.bf16.mxu0 %v468
    %621 = vmatpush1.bf16.msra.mxu0 %v467
    %622 = vmatprep.subr.bf16.mxu0 %v470
    %623 = vmatpush1.bf16.msra.mxu0 %v469
    %624 = vmatprep.subr.bf16.mxu0 %v472
    %625 = vmatpush1.bf16.msra.mxu0 %v471
    %626 = vmatprep.subr.bf16.mxu0 %v474
    %627 = vmatpush1.bf16.msra.mxu0 %v473
    %628 = vmatprep.subr.bf16.mxu0 %v476
    %629 = vmatpush1.bf16.msra.mxu0 %v475
    %630 = vmatprep.subr.bf16.mxu0 %v478
    %631 = vmatpush1.bf16.msra.mxu0 %v477
    %632 = vmatprep.subr.bf16.mxu0 %v480
    %633 = vmatpush1.bf16.msra.mxu0 %v479
    %634 = vmatprep.subr.bf16.mxu0 %v482
    %635 = vmatpush1.bf16.msra.mxu0 %v481
    %636 = vmatprep.subr.bf16.mxu0 %v484
    %637 = vmatpush1.bf16.msra.mxu0 %v483
    %638 = vmatprep.subr.bf16.mxu0 %v486
    %639 = vmatpush1.bf16.msra.mxu0 %v485
    %640 = vmatprep.subr.bf16.mxu0 %v488
    %641 = vmatpush1.bf16.msra.mxu0 %v487
    %642 = vmatprep.subr.bf16.mxu0 %v490
    %643 = vmatpush1.bf16.msra.mxu0 %v489
    %644 = vmatprep.subr.bf16.mxu0 %v492
    %645 = vmatpush1.bf16.msra.mxu0 %v491
    %646 = vmatprep.subr.bf16.mxu0 %v494
    %647 = vmatpush1.bf16.msra.mxu0 %v493
    %648 = vmatprep.mubr.bf16.mxu0 %v572
    %649 = vmatmul.mubr.bf16.gmra.mrb[0].mxu0 %v571
    %v650 = vpop.f32.mrb[0].mxu0
    %v651 = vadd.f32 0.0, %v650
    %v652 = vpop.f32.mrb[0].mxu0
    %v653 = vadd.f32 0.0, %v652
    %v654 = vpop.f32.mrb[0].mxu0
    %v655 = vpop.f32.mrb[0].mxu0
    %656 = vdwg.mxu0
    %v658 = vunpack.c.l.b16 %v158
    %v659 = vunpack.c.h.b16 %v158
    %v660 = vpack.c.b16 %v658, %v658
    %v661 = vpack.c.b16 %v659, %v659
    %664 = vmatprep.subr.bf16.mxu0 %v263
    %665 = vmatpush1.bf16.msra.mxu0 %v262
    %666 = vmatprep.subr.bf16.mxu0 %v265
    %667 = vmatpush1.bf16.msra.mxu0 %v264
    %668 = vmatprep.subr.bf16.mxu0 %v267
    %669 = vmatpush1.bf16.msra.mxu0 %v266
    %670 = vmatprep.subr.bf16.mxu0 %v269
    %671 = vmatpush1.bf16.msra.mxu0 %v268
    %672 = vmatprep.subr.bf16.mxu0 %v271
    %673 = vmatpush1.bf16.msra.mxu0 %v270
    %674 = vmatprep.subr.bf16.mxu0 %v273
    %675 = vmatpush1.bf16.msra.mxu0 %v272
    %676 = vmatprep.subr.bf16.mxu0 %v275
    %677 = vmatpush1.bf16.msra.mxu0 %v274
    %678 = vmatprep.subr.bf16.mxu0 %v277
    %679 = vmatpush1.bf16.msra.mxu0 %v276
    %680 = vmatprep.subr.bf16.mxu0 %v279
    %681 = vmatpush1.bf16.msra.mxu0 %v278
    %682 = vmatprep.subr.bf16.mxu0 %v281
    %683 = vmatpush1.bf16.msra.mxu0 %v280
    %684 = vmatprep.subr.bf16.mxu0 %v283
    %685 = vmatpush1.bf16.msra.mxu0 %v282
    %686 = vmatprep.subr.bf16.mxu0 %v285
    %687 = vmatpush1.bf16.msra.mxu0 %v284
    %688 = vmatprep.subr.bf16.mxu0 %v287
    %689 = vmatpush1.bf16.msra.mxu0 %v286
    %690 = vmatprep.subr.bf16.mxu0 %v289
    %691 = vmatpush1.bf16.msra.mxu0 %v288
    %692 = vmatprep.subr.bf16.mxu0 %v291
    %693 = vmatpush1.bf16.msra.mxu0 %v290
    %694 = vmatprep.subr.bf16.mxu0 %v293
    %695 = vmatpush1.bf16.msra.mxu0 %v292
    %696 = vmatprep.mubr.bf16.mxu0 %v661
    %697 = vmatmul.mubr.bf16.gmra.mrb[0].mxu0 %v660
    %v698 = vpop.f32.mrb[0].mxu0
    %v699 = vadd.f32 0.0, %v698
    %v700 = vpop.f32.mrb[0].mxu0
    %v701 = vadd.f32 0.0, %v700
    %v702 = vpop.f32.mrb[0].mxu0
    %v703 = vpop.f32.mrb[0].mxu0
    %704 = vdwg.mxu0
    %705 = vmatprep.subr.bf16.mxu0 %v464
    %706 = vmatpush1.bf16.msra.mxu0 %v463
    %707 = vmatprep.subr.bf16.mxu0 %v466
    %708 = vmatpush1.bf16.msra.mxu0 %v465
    %709 = vmatprep.subr.bf16.mxu0 %v468
    %710 = vmatpush1.bf16.msra.mxu0 %v467
    %711 = vmatprep.subr.bf16.mxu0 %v470
    %712 = vmatpush1.bf16.msra.mxu0 %v469
    %713 = vmatprep.subr.bf16.mxu0 %v472
    %714 = vmatpush1.bf16.msra.mxu0 %v471
    %715 = vmatprep.subr.bf16.mxu0 %v474
    %716 = vmatpush1.bf16.msra.mxu0 %v473
    %717 = vmatprep.subr.bf16.mxu0 %v476
    %718 = vmatpush1.bf16.msra.mxu0 %v475
    %719 = vmatprep.subr.bf16.mxu0 %v478
    %720 = vmatpush1.bf16.msra.mxu0 %v477
    %721 = vmatprep.subr.bf16.mxu0 %v480
    %722 = vmatpush1.bf16.msra.mxu0 %v479
    %723 = vmatprep.subr.bf16.mxu0 %v482
    %724 = vmatpush1.bf16.msra.mxu0 %v481
    %725 = vmatprep.subr.bf16.mxu0 %v484
    %726 = vmatpush1.bf16.msra.mxu0 %v483
    %727 = vmatprep.subr.bf16.mxu0 %v486
    %728 = vmatpush1.bf16.msra.mxu0 %v485
    %729 = vmatprep.subr.bf16.mxu0 %v488
    %730 = vmatpush1.bf16.msra.mxu0 %v487
    %731 = vmatprep.subr.bf16.mxu0 %v490
    %732 = vmatpush1.bf16.msra.mxu0 %v489
    %733 = vmatprep.subr.bf16.mxu0 %v492
    %734 = vmatpush1.bf16.msra.mxu0 %v491
    %735 = vmatprep.subr.bf16.mxu0 %v494
    %736 = vmatpush1.bf16.msra.mxu0 %v493
    %737 = vmatprep.mubr.bf16.mxu0 %v661
    %738 = vmatmul.mubr.bf16.gmra.mrb[0].mxu0 %v660
    %v739 = vpop.f32.mrb[0].mxu0
    %v740 = vadd.f32 0.0, %v739
    %v741 = vpop.f32.mrb[0].mxu0
    %v742 = vadd.f32 0.0, %v741
    %v743 = vpop.f32.mrb[0].mxu0
    %v744 = vpop.f32.mrb[0].mxu0
    %745 = vdwg.mxu0
    %v746 = vld [vmem:[%s5] sm:$0x3]
    %v747 = vld [vmem:[%s6] sm:$0x3]
    %v748 = vld [vmem:[%s7] sm:$0x3]
    %v750 = vlaneseq
    %v751 = vshrl.u32 %v750, 7
    %v752 = vsub.s32 0, %v751
    %v753 = vrot.slane %v748, %v752
    %v754 = vlaneseq
    %v755 = vshrl.u32 %v754, 7
    %v756 = vsub.s32 1, %v755
    %v757 = vrot.slane %v748, %v756
    %v760 = vmul.f32 %v753, %v361
    %v761 = vmul.f32 %v757, %v363
    %v763 = vlaneseq
    %v764 = vshrl.u32 %v763, 7
    %v765 = vsub.s32 0, %v764
    %v766 = vrot.slane %v746, %v765
    %v767 = vlaneseq
    %v768 = vshrl.u32 %v767, 7
    %v769 = vsub.s32 1, %v768
    %v770 = vrot.slane %v746, %v769
    %v773 = vmul.f32 %v766, %v610
    %v774 = vmul.f32 %v770, %v612
    %v775 = vsub.f32 %v760, %v773
    %v776 = vsub.f32 %v761, %v774
    %v777 = vmul.f32 %v775, %v775
    %v778 = vmul.f32 %v776, %v776
    %v779 = vsub.f32 %v562, %v651
    %v780 = vsub.f32 %v564, %v653
    %v781 = vmul.f32 %v779, %v779
    %v782 = vmul.f32 %v780, %v780
    %v783 = vadd.f32 %v777, %v781
    %v784 = vadd.f32 %v778, %v782
    %v786 = vlaneseq
    %v787 = vshrl.u32 %v786, 7
    %v788 = vsub.s32 0, %v787
    %v789 = vrot.slane %v747, %v788
    %v790 = vlaneseq
    %v791 = vshrl.u32 %v790, 7
    %v792 = vsub.s32 1, %v791
    %v793 = vrot.slane %v747, %v792
    %v796 = vmul.f32 %v789, %v699
    %v797 = vmul.f32 %v793, %v701
    %v798 = vsub.f32 %v760, %v796
    %v799 = vsub.f32 %v761, %v797
    %v800 = vmul.f32 %v798, %v798
    %v801 = vmul.f32 %v799, %v799
    %v802 = vsub.f32 %v562, %v740
    %v803 = vsub.f32 %v564, %v742
    %v804 = vmul.f32 %v802, %v802
    %v805 = vmul.f32 %v803, %v803
    %v806 = vadd.f32 %v800, %v804
    %v807 = vadd.f32 %v801, %v805
    %v808 = vrsqrt.pop %v783
    %v809 = vmul.f32 %v783, %v808
    %vm810 = vcmp.eq.f32.partialorder %v783, inf
    %v811 = vsel %vm810, %v783, %v809
    %vm812 = vcmp.eq.f32.partialorder %v783, 0.0
    %v813 = vand.u32 %v783, 2147483648
    %v814 = vsel %vm812, %v813, %v811
    %v815 = vrsqrt.pop %v784
    %v816 = vmul.f32 %v784, %v815
    %vm817 = vcmp.eq.f32.partialorder %v784, inf
    %v818 = vsel %vm817, %v784, %v816
    %vm819 = vcmp.eq.f32.partialorder %v784, 0.0
    %v820 = vand.u32 %v784, 2147483648
    %v821 = vsel %vm819, %v820, %v818
    %v822 = vrsqrt.pop %v806
    %v823 = vmul.f32 %v806, %v822
    %vm824 = vcmp.eq.f32.partialorder %v806, inf
    %v825 = vsel %vm824, %v806, %v823
    %vm826 = vcmp.eq.f32.partialorder %v806, 0.0
    %v827 = vand.u32 %v806, 2147483648
    %v828 = vsel %vm826, %v827, %v825
    %v829 = vrsqrt.pop %v807
    %v830 = vmul.f32 %v807, %v829
    %vm831 = vcmp.eq.f32.partialorder %v807, inf
    %v832 = vsel %vm831, %v807, %v830
    %vm833 = vcmp.eq.f32.partialorder %v807, 0.0
    %v834 = vand.u32 %v807, 2147483648
    %v835 = vsel %vm833, %v834, %v832
    %v836 = vmax.f32 %v814, %v821
    %837 = vmax.xlane.f32.xlu0 %v836
    %v838 = vpop.xlane.xlu0 %837
    %v839 = vmax.f32 %v828, %v835
    %840 = vmax.xlane.f32.xlu0 %v839
    %v841 = vpop.xlane.xlu0 %840
    %v842 = vrcp.pop %v838
    %v843 = vmul.f32 %v814, %v842
    %v844 = vmul.f32 %v821, %v842
    %v845 = vrcp.pop %v841
    %v846 = vmul.f32 %v828, %v845
    %v847 = vmul.f32 %v835, %v845
    %vm848 = vcmp.ne.f32.partialorder %v843, %v843
    %vm849 = vcmp.ne.f32.partialorder %v844, %v844
    %v850 = vsel %vm848, 0.0, %v843
    %v851 = vsel %vm849, 0.0, %v844
    %v852 = vmax.f32 %v850, 0.0
    %v853 = vmax.f32 %v851, 0.0
    %v854 = vmin.f32 %v852, 1.0
    %v855 = vmin.f32 %v853, 1.0
    %vm856 = vcmp.ne.f32.partialorder %v846, %v846
    %vm857 = vcmp.ne.f32.partialorder %v847, %v847
    %v858 = vsel %vm856, 0.0, %v846
    %v859 = vsel %vm857, 0.0, %v847
    %v860 = vmax.f32 %v858, 0.0
    %v861 = vmax.f32 %v859, 0.0
    %v862 = vmin.f32 %v860, 1.0
    %v863 = vmin.f32 %v861, 1.0
    %v864 = vmul.f32 %v854, %v783
    %v865 = vmul.f32 %v855, %v784
    %v866 = vmul.f32 %v862, %v806
    %v867 = vmul.f32 %v863, %v807
    %v868 = vadd.f32 %v864, %v866
    %v869 = vadd.f32 %v865, %v867
    %v870 = vadd.f32 %v854, %v862
    %v871 = vadd.f32 %v855, %v863
    %v872 = vrcp.pop %v870
    %v873 = vrcp.pop %v871
    %v874 = vmul.f32 %v868, %v872
    %v875 = vmul.f32 %v869, %v873
    %s876 = smul.u32 0, 8
    %v877 = vlaneseq
    %v878 = vshrl.u32 %v877, 7
    %v879 = vstv %s876
    %v880 = vadd.s32 %v879, %v878
    %vm881 = vcmp.lt.s32.totalorder %v880, 2
    %v882 = vsel %vm881, 1, 0
    %vm883 = vcmp.eq.s32.totalorder %v882, 1
    %v884 = vsel %vm883, %v874, 0.0
    %v885 = vsel %vm883, %v875, 0.0
    %v886 = vadd.f32 %v884, 0.0
    %v887 = vadd.f32 %v885, 0.0
    %888 = vst [vmem:[#allocation11] sm:$0xff] %v886
    %889 = vst [vmem:[#allocation11 + $0x8] sm:$0xff] %v887
    // Predicated region
    $region54: #{tpu_custom_call.1} parent=1 // pred_check
      _
    $region55: #{tpu_custom_call.1} parent=1 // pred_check_branch
      %891 = sbr.rel (0) target = $region57
    $region56: #{tpu_custom_call.1} parent=1 // pred_region
      %s893 = ssub.s32 256, 256
      %894 = vsyncadd [#allocation4], %s893
      %s896 = sshll.u32 [#allocation11], 4
      %s897 = int_to_ptr.vmem [resolvable:$true] %s896
      %899 = dma.vmem_to_hbm [thread:$0]  %s897, 256, %s8, [#allocation4]
    $region57: #{tpu_custom_call.1} parent=1 // pred_fallthru
      _
    // Predicated region
    $region58: #{tpu_custom_call.1} parent=1 // pred_check
      _
    $region59: #{tpu_custom_call.1} parent=1 // pred_check_branch
      %901 = sbr.rel (0) target = $region61
    $region60: #{tpu_custom_call.1} parent=1 // pred_region
      %902 = dma.done [#allocation4], 256
    $region61: #{tpu_custom_call.1} parent=1 // pred_fallthru
      _
    %903 = vsyncpa [#allocation3], 1
    %904 = vsyncpa [#allocation6], 1
    %905 = vsyncpa [#allocation9], 1
    %906 = vsyncpa [#allocation4], 1

</llo_original>
